<compile_context>
chip_gen: v6e
topology: v6e:2x2x1
jax: 0.10.0
libtpu: 0.0.40
codegen_flags: <defaults>
</compile_context>

<pallas_src>
import jax
import jax.numpy as jnp
from jax.experimental import pallas as pl
from jax.experimental.pallas import tpu as pltpu

_TILE_B = 1024  # batch rows per grid step (~0.5 MiB of padded x per buffer)


def _classifier_kernel(x_ref, w1_ref, b1_ref, w2t_ref, b2_ref, o_ref):
    # dense1: [TILE_B, 7] @ [7, 20] + [1, 20]  (f32 accumulate on the MXU)
    h = jnp.dot(x_ref[...], w1_ref[...], preferred_element_type=jnp.float32)
    h = jnp.maximum(h + b1_ref[...], 0.0)  # ReLU
    # Dropout(p=0.5): inference-mode identity (PyTorch eval() semantics).
    # TODO(synk): training-mode stochastic dropout (pltpu.prng_seed /
    # pltpu.prng_random_bits masking) not emitted here.
    #
    # output layer, lane-dense: (2, TILE_B) = w2^T @ h^T, expressed as the
    # well-supported `a @ b.T` contraction (contract dim 1 of both operands).
    out_t = jax.lax.dot_general(
        w2t_ref[...],                      # (2, 20)
        h,                                 # (TILE_B, 20)
        dimension_numbers=(((1,), (1,)), ((), ())),
        preferred_element_type=jnp.float32,
    )                                      # -> (2, TILE_B), batch on lanes
    o_ref[...] = (out_t + b2_ref[...]).astype(o_ref.dtype)


def _classifier_reference(x, w1, b1, w2, b2):
    """Plain-JAX reference / small-batch fast path (XLA fuses this)."""
    h = jnp.maximum(x @ w1 + b1.reshape(1, -1), 0.0)
    return h @ w2 + b2.reshape(1, -1)


def classifier_forward_pallas(x, w1, b1, w2, b2, *, tile_b=_TILE_B):
    """x: [B, 7] f32 -> [B, 2] f32 via the Pallas kernel."""
    B, F = x.shape
    assert F == 7, f"expected 7 input features, got {F}"
    num_tiles = pl.cdiv(B, tile_b)
    b_pad = num_tiles * tile_b
    if b_pad != B:
        # Zero-pad the tail tile; padded rows are sliced off below.
        x = jnp.pad(x, ((0, b_pad - B), (0, 0)))

    w1 = w1.astype(jnp.float32)
    b1r = b1.reshape(1, 20).astype(jnp.float32)
    w2t = jnp.transpose(w2).astype(jnp.float32)   # (2, 20)
    b2r = b2.reshape(2, 1).astype(jnp.float32)    # broadcasts along lanes

    out_t = pl.pallas_call(
        _classifier_kernel,
        out_shape=jax.ShapeDtypeStruct((2, b_pad), jnp.float32),
        grid=(num_tiles,),
        in_specs=[
            pl.BlockSpec((tile_b, 7), lambda i: (i, 0)),   # x: pipelined
            pl.BlockSpec((7, 20), lambda i: (0, 0)),       # w1: VMEM-resident
            pl.BlockSpec((1, 20), lambda i: (0, 0)),       # b1: VMEM-resident
            pl.BlockSpec((2, 20), lambda i: (0, 0)),       # w2^T: VMEM-resident
            pl.BlockSpec((2, 1), lambda i: (0, 0)),        # b2: VMEM-resident
        ],
        out_specs=pl.BlockSpec((2, tile_b), lambda i: (0, i)),  # lane-dense
        compiler_params=pltpu.CompilerParams(
            dimension_semantics=("parallel",),  # megacore sharding on v7x
        ),
    )(x, w1, b1r, w2t, b2r)

    return out_t[:, :B].T  # (B, 2)


def classifier_forward(x, w1, b1, w2, b2, *, min_pallas_batch=1024,
                       tile_b=_TILE_B):
    """Size-based dispatch: tiny batches are cheaper as one fused XLA expr."""
    if x.shape[0] < min_pallas_batch:
        return _classifier_reference(x, w1, b1, w2, b2)
    return classifier_forward_pallas(x, w1, b1, w2, b2, tile_b=tile_b)


def init_params(key, output_bias=None):
    k1, k2, k3, k4 = jax.random.split(key, 4)
    # Deterministic, PyTorch-Linear-like uniform init U(-1/sqrt(fan_in), 1/sqrt(fan_in)).
    lim1 = 1.0 / jnp.sqrt(7.0)
    lim2 = 1.0 / jnp.sqrt(20.0)
    w1 = jax.random.uniform(k1, (7, 20), jnp.float32, -lim1, lim1)
    b1 = jax.random.uniform(k2, (1, 20), jnp.float32, -lim1, lim1)
    w2 = jax.random.uniform(k3, (20, 2), jnp.float32, -lim2, lim2)
    if output_bias is not None:
        b2 = jnp.full((1, 2), float(output_bias), jnp.float32)
    else:
        b2 = jax.random.uniform(k4, (1, 2), jnp.float32, -lim2, lim2)
    return w1, b1, w2, b2


if __name__ == "__main__":
    key = jax.random.PRNGKey(0)
    kx, kp = jax.random.split(key)
    w1, b1, w2, b2 = init_params(kp, output_bias=None)

    # 1) Small batch, forcing the Pallas path (the dispatching wrapper would
    #    normally route this through fused XLA).
    B_small = 8
    x_small = jax.random.normal(kx, (B_small, 7), jnp.float32)
    out_small = jax.block_until_ready(
        classifier_forward_pallas(x_small, w1, b1, w2, b2))
    ref_small = _classifier_reference(x_small, w1, b1, w2, b2)
    assert out_small.shape == (B_small, 2)
    assert jnp.allclose(out_small, ref_small, atol=1e-4, rtol=1e-4)

    # 2) Multi-tile ragged batch (grid of 3 with a zero-padded tail tile).
    B_big = 2 * _TILE_B + 356
    x_big = jax.random.normal(kx, (B_big, 7), jnp.float32)
    out_big = jax.block_until_ready(classifier_forward(x_big, w1, b1, w2, b2))
    ref_big = _classifier_reference(x_big, w1, b1, w2, b2)
    assert out_big.shape == (B_big, 2)
    assert jnp.allclose(out_big, ref_big, atol=1e-4, rtol=1e-4)

    print("KERNEL_OK")
</pallas_src>

<mosaic_0001>
module attributes {stable_mosaic.version = 11 : i64} {
  func.func @_classifier_kernel(%arg0: i32, %arg1: memref<1024x7xf32, #tpu.memory_space<vmem>>, %arg2: memref<7x20xf32, #tpu.memory_space<vmem>>, %arg3: memref<1x20xf32, #tpu.memory_space<vmem>>, %arg4: memref<2x20xf32, #tpu.memory_space<vmem>>, %arg5: memref<2x1xf32, #tpu.memory_space<vmem>>, %arg6: memref<2x1024xf32, #tpu.memory_space<vmem>>) attributes {dimension_semantics = [#tpu.dimension_semantics<parallel>], iteration_bounds = array<i64: 1>, scalar_prefetch = 0 : i64, scratch_operands = 0 : i64, tpu.core_type = #tpu.core_type<tc>, window_params = [{transform_indices = @transform_0, window_bounds = array<i64: 1024, 7>}, {pipeline_mode = #tpu.pipeline_mode<synchronous>, transform_indices = @transform_1, window_bounds = array<i64: 7, 20>}, {pipeline_mode = #tpu.pipeline_mode<synchronous>, transform_indices = @transform_2, window_bounds = array<i64: 1, 20>}, {pipeline_mode = #tpu.pipeline_mode<synchronous>, transform_indices = @transform_3, window_bounds = array<i64: 2, 20>}, {pipeline_mode = #tpu.pipeline_mode<synchronous>, transform_indices = @transform_4, window_bounds = array<i64: 2, 1>}, {transform_indices = @transform_5, window_bounds = array<i64: 2, 1024>}]} {
    %c0 = arith.constant 0 : index
    %c0_0 = arith.constant 0 : index
    %0 = vector.load %arg1[%c0, %c0_0] : memref<1024x7xf32, #tpu.memory_space<vmem>>, vector<1024x7xf32>
    %c0_1 = arith.constant 0 : index
    %c0_2 = arith.constant 0 : index
    %1 = vector.load %arg2[%c0_1, %c0_2] : memref<7x20xf32, #tpu.memory_space<vmem>>, vector<7x20xf32>
    %cst = arith.constant dense<0.000000e+00> : vector<1024x20xf32>
    %2 = tpu.matmul %0, %1, %cst {dimension_numbers = #tpu.dot_dimension_numbers<[1], [0], [0], [1], [0, 0, 1, 1], [], []>} : vector<1024x7xf32>, vector<7x20xf32>, vector<1024x20xf32> -> vector<1024x20xf32>
    %c0_3 = arith.constant 0 : index
    %c0_4 = arith.constant 0 : index
    %3 = vector.load %arg3[%c0_3, %c0_4] : memref<1x20xf32, #tpu.memory_space<vmem>>, vector<1x20xf32>
    %4 = vector.broadcast %3 : vector<1x20xf32> to vector<1024x20xf32>
    %5 = arith.addf %2, %4 : vector<1024x20xf32>
    %cst_5 = arith.constant 0.000000e+00 : f32
    %6 = vector.broadcast %cst_5 : f32 to vector<1024x20xf32>
    %7 = arith.maximumf %5, %6 : vector<1024x20xf32>
    %c0_6 = arith.constant 0 : index
    %c0_7 = arith.constant 0 : index
    %8 = vector.load %arg4[%c0_6, %c0_7] : memref<2x20xf32, #tpu.memory_space<vmem>>, vector<2x20xf32>
    %cst_8 = arith.constant dense<0.000000e+00> : vector<2x1024xf32>
    %9 = tpu.matmul %8, %7, %cst_8 {dimension_numbers = #tpu.dot_dimension_numbers<[1], [1], [0], [0], [0, 0, 1, 0], [], []>} : vector<2x20xf32>, vector<1024x20xf32>, vector<2x1024xf32> -> vector<2x1024xf32>
    %c0_9 = arith.constant 0 : index
    %c0_10 = arith.constant 0 : index
    %10 = vector.load %arg5[%c0_9, %c0_10] : memref<2x1xf32, #tpu.memory_space<vmem>>, vector<2x1xf32>
    %11 = vector.broadcast %10 : vector<2x1xf32> to vector<2x1024xf32>
    %12 = arith.addf %9, %11 : vector<2x1024xf32>
    %c0_11 = arith.constant 0 : index
    %c0_12 = arith.constant 0 : index
    %13 = vector.load %arg6[%c0_11, %c0_12] : memref<2x1024xf32, #tpu.memory_space<vmem>>, vector<2x1024xf32>
    tpu.vector_store %arg6[%c0_11, %c0_12], %12 {strides = array<i32>} : memref<2x1024xf32, #tpu.memory_space<vmem>>, vector<2x1024xf32>,
    return
  }
  func.func @transform_0(%arg0: i32) -> (i32, i32) {
    %c0_i32 = arith.constant 0 : i32
    %c0_i32_0 = arith.constant 0 : i32
    return %arg0, %c0_i32 : i32, i32
  }
  func.func @transform_1(%arg0: i32) -> (i32, i32) {
    %c0_i32 = arith.constant 0 : i32
    %c0_i32_0 = arith.constant 0 : i32
    %c0_i32_1 = arith.constant 0 : i32
    return %c0_i32, %c0_i32_0 : i32, i32
  }
  func.func @transform_2(%arg0: i32) -> (i32, i32) {
    %c0_i32 = arith.constant 0 : i32
    %c0_i32_0 = arith.constant 0 : i32
    %c0_i32_1 = arith.constant 0 : i32
    return %c0_i32, %c0_i32_0 : i32, i32
  }
  func.func @transform_3(%arg0: i32) -> (i32, i32) {
    %c0_i32 = arith.constant 0 : i32
    %c0_i32_0 = arith.constant 0 : i32
    %c0_i32_1 = arith.constant 0 : i32
    return %c0_i32, %c0_i32_0 : i32, i32
  }
  func.func @transform_4(%arg0: i32) -> (i32, i32) {
    %c0_i32 = arith.constant 0 : i32
    %c0_i32_0 = arith.constant 0 : i32
    %c0_i32_1 = arith.constant 0 : i32
    return %c0_i32, %c0_i32_0 : i32, i32
  }
  func.func @transform_5(%arg0: i32) -> (i32, i32) {
    %c0_i32 = arith.constant 0 : i32
    %c0_i32_0 = arith.constant 0 : i32
    return %c0_i32, %arg0 : i32, i32
  }
}

</mosaic_0001>

<llo_original>
// kernel: tpu_custom_call.1
$region0: #{tpu_custom_call.1}
  #allocation0 [shape = 'u32[]', space=smem, size = 0x4, offset = 0x4, fixed_abs, tag = 'smem constant byte address 0x4 - core index']
  #allocation1 [shape = 'u32[144,128]{1,0:T(1,128)}', space=vmem, size = 0x12000, scoped, tag = 'internal scratch']
  %s0 = inlined_call_operand.vmem [shape: f32[1024,7], index: 0, kind: input, shape index: {}]
  %s1 = inlined_call_operand.vmem [shape: f32[7,20], index: 1, kind: input, shape index: {}]
  %s2 = inlined_call_operand.vmem [shape: f32[1,20], index: 2, kind: input, shape index: {}]
  %s3 = inlined_call_operand.vmem [shape: f32[2,20], index: 3, kind: input, shape index: {}]
  %s4 = inlined_call_operand.vmem [shape: f32[2,1], index: 4, kind: input, shape index: {}]
  %s5 = inlined_call_operand.hbm [shape: f32[2,1024], index: 5, kind: output, shape index: {}]
  %s6 = sld [smem:[#allocation0]]
  $region30: #{tpu_custom_call.1} parent=0
    _
  %s8 = ssub.s32 1, %s6
  %s9 = scalar_select 0, %s8, %s6
  $region1: #{tpu_custom_call.1} parent=0
    #allocation2 [shape = 'u8[8192]{0}', space=vmem, size = 0x2000, scoped, tag = 'output window, operand 0, single buffered']
    #allocation3 [shape = 's32[1]{0}', space=sflag, size = 0x4, scoped, tag = 'scoped memory for tpu_custom_call.1']
    %10 = vsyncpa [#allocation3], 0
    // Predicated region
    $region2: #{tpu_custom_call.1} parent=1 // pred_check
      _
    $region3: #{tpu_custom_call.1} parent=1 // pred_check_branch
      %12 = sbr.rel (0) target = $region5
    $region4: #{tpu_custom_call.1} parent=1 // pred_region
      _
    $region5: #{tpu_custom_call.1} parent=1 // pred_fallthru
      _
    // Predicated region
    $region6: #{tpu_custom_call.1} parent=1 // pred_check
      _
    $region7: #{tpu_custom_call.1} parent=1 // pred_check_branch
      %14 = sbr.rel (0) target = $region9
    $region8: #{tpu_custom_call.1} parent=1 // pred_region
      _
    $region9: #{tpu_custom_call.1} parent=1 // pred_fallthru
      _
    // Predicated region
    $region10: #{tpu_custom_call.1} parent=1 // pred_check
      _
    $region11: #{tpu_custom_call.1} parent=1 // pred_check_branch
      %16 = sbr.rel (0) target = $region13
    $region12: #{tpu_custom_call.1} parent=1 // pred_region
      _
    $region13: #{tpu_custom_call.1} parent=1 // pred_fallthru
      _
    // Predicated region
    $region14: #{tpu_custom_call.1} parent=1 // pred_check
      _
    $region15: #{tpu_custom_call.1} parent=1 // pred_check_branch
      %18 = sbr.rel (0) target = $region17
    $region16: #{tpu_custom_call.1} parent=1 // pred_region
      _
    $region17: #{tpu_custom_call.1} parent=1 // pred_fallthru
      _
    // Predicated region
    $region18: #{tpu_custom_call.1} parent=1 // pred_check
      _
    $region19: #{tpu_custom_call.1} parent=1 // pred_check_branch
      %20 = sbr.rel (0) target = $region21
    $region20: #{tpu_custom_call.1} parent=1 // pred_region
      _
    $region21: #{tpu_custom_call.1} parent=1 // pred_fallthru
      _
    %v21 = vld [vmem:[%s0] sm:$0xff]
    %v22 = vld [vmem:[%s0 + $0x8] sm:$0xff]
    %v23 = vld [vmem:[%s0 + $0x10] sm:$0xff]
    %v24 = vld [vmem:[%s0 + $0x18] sm:$0xff]
    %v25 = vld [vmem:[%s0 + $0x20] sm:$0xff]
    %v26 = vld [vmem:[%s0 + $0x28] sm:$0xff]
    %v27 = vld [vmem:[%s0 + $0x30] sm:$0xff]
    %v28 = vld [vmem:[%s0 + $0x38] sm:$0xff]
    %v29 = vld [vmem:[%s0 + $0x40] sm:$0xff]
    %v30 = vld [vmem:[%s0 + $0x48] sm:$0xff]
    %v31 = vld [vmem:[%s0 + $0x50] sm:$0xff]
    %v32 = vld [vmem:[%s0 + $0x58] sm:$0xff]
    %v33 = vld [vmem:[%s0 + $0x60] sm:$0xff]
    %v34 = vld [vmem:[%s0 + $0x68] sm:$0xff]
    %v35 = vld [vmem:[%s0 + $0x70] sm:$0xff]
    %v36 = vld [vmem:[%s0 + $0x78] sm:$0xff]
    %v37 = vld [vmem:[%s0 + $0x80] sm:$0xff]
    %v38 = vld [vmem:[%s0 + $0x88] sm:$0xff]
    %v39 = vld [vmem:[%s0 + $0x90] sm:$0xff]
    %v40 = vld [vmem:[%s0 + $0x98] sm:$0xff]
    %v41 = vld [vmem:[%s0 + $0xa0] sm:$0xff]
    %v42 = vld [vmem:[%s0 + $0xa8] sm:$0xff]
    %v43 = vld [vmem:[%s0 + $0xb0] sm:$0xff]
    %v44 = vld [vmem:[%s0 + $0xb8] sm:$0xff]
    %v45 = vld [vmem:[%s0 + $0xc0] sm:$0xff]
    %v46 = vld [vmem:[%s0 + $0xc8] sm:$0xff]
    %v47 = vld [vmem:[%s0 + $0xd0] sm:$0xff]
    %v48 = vld [vmem:[%s0 + $0xd8] sm:$0xff]
    %v49 = vld [vmem:[%s0 + $0xe0] sm:$0xff]
    %v50 = vld [vmem:[%s0 + $0xe8] sm:$0xff]
    %v51 = vld [vmem:[%s0 + $0xf0] sm:$0xff]
    %v52 = vld [vmem:[%s0 + $0xf8] sm:$0xff]
    %v53 = vld [vmem:[%s0 + $0x100] sm:$0xff]
    %v54 = vld [vmem:[%s0 + $0x108] sm:$0xff]
    %v55 = vld [vmem:[%s0 + $0x110] sm:$0xff]
    %v56 = vld [vmem:[%s0 + $0x118] sm:$0xff]
    %v57 = vld [vmem:[%s0 + $0x120] sm:$0xff]
    %v58 = vld [vmem:[%s0 + $0x128] sm:$0xff]
    %v59 = vld [vmem:[%s0 + $0x130] sm:$0xff]
    %v60 = vld [vmem:[%s0 + $0x138] sm:$0xff]
    %v61 = vld [vmem:[%s0 + $0x140] sm:$0xff]
    %v62 = vld [vmem:[%s0 + $0x148] sm:$0xff]
    %v63 = vld [vmem:[%s0 + $0x150] sm:$0xff]
    %v64 = vld [vmem:[%s0 + $0x158] sm:$0xff]
    %v65 = vld [vmem:[%s0 + $0x160] sm:$0xff]
    %v66 = vld [vmem:[%s0 + $0x168] sm:$0xff]
    %v67 = vld [vmem:[%s0 + $0x170] sm:$0xff]
    %v68 = vld [vmem:[%s0 + $0x178] sm:$0xff]
    %v69 = vld [vmem:[%s0 + $0x180] sm:$0xff]
    %v70 = vld [vmem:[%s0 + $0x188] sm:$0xff]
    %v71 = vld [vmem:[%s0 + $0x190] sm:$0xff]
    %v72 = vld [vmem:[%s0 + $0x198] sm:$0xff]
    %v73 = vld [vmem:[%s0 + $0x1a0] sm:$0xff]
    %v74 = vld [vmem:[%s0 + $0x1a8] sm:$0xff]
    %v75 = vld [vmem:[%s0 + $0x1b0] sm:$0xff]
    %v76 = vld [vmem:[%s0 + $0x1b8] sm:$0xff]
    %v77 = vld [vmem:[%s0 + $0x1c0] sm:$0xff]
    %v78 = vld [vmem:[%s0 + $0x1c8] sm:$0xff]
    %v79 = vld [vmem:[%s0 + $0x1d0] sm:$0xff]
    %v80 = vld [vmem:[%s0 + $0x1d8] sm:$0xff]
    %v81 = vld [vmem:[%s0 + $0x1e0] sm:$0xff]
    %v82 = vld [vmem:[%s0 + $0x1e8] sm:$0xff]
    %v83 = vld [vmem:[%s0 + $0x1f0] sm:$0xff]
    %v84 = vld [vmem:[%s0 + $0x1f8] sm:$0xff]
    %v85 = vld [vmem:[%s0 + $0x200] sm:$0xff]
    %v86 = vld [vmem:[%s0 + $0x208] sm:$0xff]
    %v87 = vld [vmem:[%s0 + $0x210] sm:$0xff]
    %v88 = vld [vmem:[%s0 + $0x218] sm:$0xff]
    %v89 = vld [vmem:[%s0 + $0x220] sm:$0xff]
    %v90 = vld [vmem:[%s0 + $0x228] sm:$0xff]
    %v91 = vld [vmem:[%s0 + $0x230] sm:$0xff]
    %v92 = vld [vmem:[%s0 + $0x238] sm:$0xff]
    %v93 = vld [vmem:[%s0 + $0x240] sm:$0xff]
    %v94 = vld [vmem:[%s0 + $0x248] sm:$0xff]
    %v95 = vld [vmem:[%s0 + $0x250] sm:$0xff]
    %v96 = vld [vmem:[%s0 + $0x258] sm:$0xff]
    %v97 = vld [vmem:[%s0 + $0x260] sm:$0xff]
    %v98 = vld [vmem:[%s0 + $0x268] sm:$0xff]
    %v99 = vld [vmem:[%s0 + $0x270] sm:$0xff]
    %v100 = vld [vmem:[%s0 + $0x278] sm:$0xff]
    %v101 = vld [vmem:[%s0 + $0x280] sm:$0xff]
    %v102 = vld [vmem:[%s0 + $0x288] sm:$0xff]
    %v103 = vld [vmem:[%s0 + $0x290] sm:$0xff]
    %v104 = vld [vmem:[%s0 + $0x298] sm:$0xff]
    %v105 = vld [vmem:[%s0 + $0x2a0] sm:$0xff]
    %v106 = vld [vmem:[%s0 + $0x2a8] sm:$0xff]
    %v107 = vld [vmem:[%s0 + $0x2b0] sm:$0xff]
    %v108 = vld [vmem:[%s0 + $0x2b8] sm:$0xff]
    %v109 = vld [vmem:[%s0 + $0x2c0] sm:$0xff]
    %v110 = vld [vmem:[%s0 + $0x2c8] sm:$0xff]
    %v111 = vld [vmem:[%s0 + $0x2d0] sm:$0xff]
    %v112 = vld [vmem:[%s0 + $0x2d8] sm:$0xff]
    %v113 = vld [vmem:[%s0 + $0x2e0] sm:$0xff]
    %v114 = vld [vmem:[%s0 + $0x2e8] sm:$0xff]
    %v115 = vld [vmem:[%s0 + $0x2f0] sm:$0xff]
    %v116 = vld [vmem:[%s0 + $0x2f8] sm:$0xff]
    %v117 = vld [vmem:[%s0 + $0x300] sm:$0xff]
    %v118 = vld [vmem:[%s0 + $0x308] sm:$0xff]
    %v119 = vld [vmem:[%s0 + $0x310] sm:$0xff]
    %v120 = vld [vmem:[%s0 + $0x318] sm:$0xff]
    %v121 = vld [vmem:[%s0 + $0x320] sm:$0xff]
    %v122 = vld [vmem:[%s0 + $0x328] sm:$0xff]
    %v123 = vld [vmem:[%s0 + $0x330] sm:$0xff]
    %v124 = vld [vmem:[%s0 + $0x338] sm:$0xff]
    %v125 = vld [vmem:[%s0 + $0x340] sm:$0xff]
    %v126 = vld [vmem:[%s0 + $0x348] sm:$0xff]
    %v127 = vld [vmem:[%s0 + $0x350] sm:$0xff]
    %v128 = vld [vmem:[%s0 + $0x358] sm:$0xff]
    %v129 = vld [vmem:[%s0 + $0x360] sm:$0xff]
    %v130 = vld [vmem:[%s0 + $0x368] sm:$0xff]
    %v131 = vld [vmem:[%s0 + $0x370] sm:$0xff]
    %v132 = vld [vmem:[%s0 + $0x378] sm:$0xff]
    %v133 = vld [vmem:[%s0 + $0x380] sm:$0xff]
    %v134 = vld [vmem:[%s0 + $0x388] sm:$0xff]
    %v135 = vld [vmem:[%s0 + $0x390] sm:$0xff]
    %v136 = vld [vmem:[%s0 + $0x398] sm:$0xff]
    %v137 = vld [vmem:[%s0 + $0x3a0] sm:$0xff]
    %v138 = vld [vmem:[%s0 + $0x3a8] sm:$0xff]
    %v139 = vld [vmem:[%s0 + $0x3b0] sm:$0xff]
    %v140 = vld [vmem:[%s0 + $0x3b8] sm:$0xff]
    %v141 = vld [vmem:[%s0 + $0x3c0] sm:$0xff]
    %v142 = vld [vmem:[%s0 + $0x3c8] sm:$0xff]
    %v143 = vld [vmem:[%s0 + $0x3d0] sm:$0xff]
    %v144 = vld [vmem:[%s0 + $0x3d8] sm:$0xff]
    %v145 = vld [vmem:[%s0 + $0x3e0] sm:$0xff]
    %v146 = vld [vmem:[%s0 + $0x3e8] sm:$0xff]
    %v147 = vld [vmem:[%s0 + $0x3f0] sm:$0xff]
    %v148 = vld [vmem:[%s0 + $0x3f8] sm:$0xff]
    %v149 = vld [vmem:[%s1] sm:$0x7f]
    %v150 = vld [vmem:[%s2] sm:$0x1]
    %v152 = vlaneseq
    %v153 = vshrl.u32 %v152, 7
    %v154 = vsub.s32 0, %v153
    %v155 = vrot.slane %v150, %v154
    %vm157 = vcmask 56320
    %v159 = vsel %vm157, %v21, 0
    %v162 = vsel %vm157, %v22, 0
    %v165 = vsel %vm157, %v23, 0
    %v168 = vsel %vm157, %v24, 0
    %v171 = vsel %vm157, %v25, 0
    %v174 = vsel %vm157, %v26, 0
    %v177 = vsel %vm157, %v27, 0
    %v180 = vsel %vm157, %v28, 0
    %v183 = vsel %vm157, %v29, 0
    %v186 = vsel %vm157, %v30, 0
    %v189 = vsel %vm157, %v31, 0
    %v192 = vsel %vm157, %v32, 0
    %v195 = vsel %vm157, %v33, 0
    %v198 = vsel %vm157, %v34, 0
    %v201 = vsel %vm157, %v35, 0
    %v204 = vsel %vm157, %v36, 0
    %v207 = vsel %vm157, %v37, 0
    %v210 = vsel %vm157, %v38, 0
    %v213 = vsel %vm157, %v39, 0
    %v216 = vsel %vm157, %v40, 0
    %v219 = vsel %vm157, %v41, 0
    %v222 = vsel %vm157, %v42, 0
    %v225 = vsel %vm157, %v43, 0
    %v228 = vsel %vm157, %v44, 0
    %v231 = vsel %vm157, %v45, 0
    %v234 = vsel %vm157, %v46, 0
    %v237 = vsel %vm157, %v47, 0
    %v240 = vsel %vm157, %v48, 0
    %v243 = vsel %vm157, %v49, 0
    %v246 = vsel %vm157, %v50, 0
    %v249 = vsel %vm157, %v51, 0
    %v252 = vsel %vm157, %v52, 0
    %v255 = vsel %vm157, %v53, 0
    %v258 = vsel %vm157, %v54, 0
    %v261 = vsel %vm157, %v55, 0
    %v264 = vsel %vm157, %v56, 0
    %v267 = vsel %vm157, %v57, 0
    %v270 = vsel %vm157, %v58, 0
    %v273 = vsel %vm157, %v59, 0
    %v276 = vsel %vm157, %v60, 0
    %v279 = vsel %vm157, %v61, 0
    %v282 = vsel %vm157, %v62, 0
    %v285 = vsel %vm157, %v63, 0
    %v288 = vsel %vm157, %v64, 0
    %v291 = vsel %vm157, %v65, 0
    %v294 = vsel %vm157, %v66, 0
    %v297 = vsel %vm157, %v67, 0
    %v300 = vsel %vm157, %v68, 0
    %v303 = vsel %vm157, %v69, 0
    %v306 = vsel %vm157, %v70, 0
    %v309 = vsel %vm157, %v71, 0
    %v312 = vsel %vm157, %v72, 0
    %v315 = vsel %vm157, %v73, 0
    %v318 = vsel %vm157, %v74, 0
    %v321 = vsel %vm157, %v75, 0
    %v324 = vsel %vm157, %v76, 0
    %v327 = vsel %vm157, %v77, 0
    %v330 = vsel %vm157, %v78, 0
    %v333 = vsel %vm157, %v79, 0
    %v336 = vsel %vm157, %v80, 0
    %v339 = vsel %vm157, %v81, 0
    %v342 = vsel %vm157, %v82, 0
    %v345 = vsel %vm157, %v83, 0
    %v348 = vsel %vm157, %v84, 0
    %v351 = vsel %vm157, %v85, 0
    %v354 = vsel %vm157, %v86, 0
    %v357 = vsel %vm157, %v87, 0
    %v360 = vsel %vm157, %v88, 0
    %v363 = vsel %vm157, %v89, 0
    %v366 = vsel %vm157, %v90, 0
    %v369 = vsel %vm157, %v91, 0
    %v372 = vsel %vm157, %v92, 0
    %v375 = vsel %vm157, %v93, 0
    %v378 = vsel %vm157, %v94, 0
    %v381 = vsel %vm157, %v95, 0
    %v384 = vsel %vm157, %v96, 0
    %v387 = vsel %vm157, %v97, 0
    %v390 = vsel %vm157, %v98, 0
    %v393 = vsel %vm157, %v99, 0
    %v396 = vsel %vm157, %v100, 0
    %v399 = vsel %vm157, %v101, 0
    %v402 = vsel %vm157, %v102, 0
    %v405 = vsel %vm157, %v103, 0
    %v408 = vsel %vm157, %v104, 0
    %v411 = vsel %vm157, %v105, 0
    %v414 = vsel %vm157, %v106, 0
    %v417 = vsel %vm157, %v107, 0
    %v420 = vsel %vm157, %v108, 0
    %v423 = vsel %vm157, %v109, 0
    %v426 = vsel %vm157, %v110, 0
    %v429 = vsel %vm157, %v111, 0
    %v432 = vsel %vm157, %v112, 0
    %v435 = vsel %vm157, %v113, 0
    %v438 = vsel %vm157, %v114, 0
    %v441 = vsel %vm157, %v115, 0
    %v444 = vsel %vm157, %v116, 0
    %v447 = vsel %vm157, %v117, 0
    %v450 = vsel %vm157, %v118, 0
    %v453 = vsel %vm157, %v119, 0
    %v456 = vsel %vm157, %v120, 0
    %v459 = vsel %vm157, %v121, 0
    %v462 = vsel %vm157, %v122, 0
    %v465 = vsel %vm157, %v123, 0
    %v468 = vsel %vm157, %v124, 0
    %v471 = vsel %vm157, %v125, 0
    %v474 = vsel %vm157, %v126, 0
    %v477 = vsel %vm157, %v127, 0
    %v480 = vsel %vm157, %v128, 0
    %v483 = vsel %vm157, %v129, 0
    %v486 = vsel %vm157, %v130, 0
    %v489 = vsel %vm157, %v131, 0
    %v492 = vsel %vm157, %v132, 0
    %v495 = vsel %vm157, %v133, 0
    %v498 = vsel %vm157, %v134, 0
    %v501 = vsel %vm157, %v135, 0
    %v504 = vsel %vm157, %v136, 0
    %v507 = vsel %vm157, %v137, 0
    %v510 = vsel %vm157, %v138, 0
    %v513 = vsel %vm157, %v139, 0
    %v516 = vsel %vm157, %v140, 0
    %v519 = vsel %vm157, %v141, 0
    %v522 = vsel %vm157, %v142, 0
    %v525 = vsel %vm157, %v143, 0
    %v528 = vsel %vm157, %v144, 0
    %v531 = vsel %vm157, %v145, 0
    %v534 = vsel %vm157, %v146, 0
    %v537 = vsel %vm157, %v147, 0
    %v540 = vsel %vm157, %v148, 0
    %vm542 = vcmask 1046528
    %v544 = vsel %vm542, %v149, 0
    %546 = vmatprep.subr.mxu0 0.0
    %547 = vmatpush1.msra.mxu0 0.0
    %548 = vmatprep.subr.mxu0 0.0
    %549 = vmatpush1.msra.mxu0 0.0
    %550 = vmatprep.subr.mxu0 0.0
    %551 = vmatpush1.msra.mxu0 0.0
    %552 = vmatprep.subr.mxu0 0.0
    %553 = vmatpush1.msra.mxu0 0.0
    %554 = vmatprep.subr.mxu0 0.0
    %555 = vmatpush1.msra.mxu0 0.0
    %556 = vmatprep.subr.mxu0 0.0
    %557 = vmatpush1.msra.mxu0 0.0
    %558 = vmatprep.subr.mxu0 0.0
    %559 = vmatpush1.msra.mxu0 0.0
    %560 = vmatprep.subr.mxu0 0.0
    %561 = vmatpush1.msra.mxu0 0.0
    %562 = vmatprep.subr.mxu0 0.0
    %563 = vmatpush1.msra.mxu0 0.0
    %564 = vmatprep.subr.mxu0 0.0
    %565 = vmatpush1.msra.mxu0 0.0
    %566 = vmatprep.subr.mxu0 0.0
    %567 = vmatpush1.msra.mxu0 0.0
    %568 = vmatprep.subr.mxu0 0.0
    %569 = vmatpush1.msra.mxu0 0.0
    %570 = vmatprep.subr.mxu0 0.0
    %571 = vmatpush1.msra.mxu0 0.0
    %572 = vmatprep.subr.mxu0 0.0
    %573 = vmatpush1.msra.mxu0 0.0
    %574 = vmatprep.subr.mxu0 0.0
    %575 = vmatpush1.msra.mxu0 0.0
    %576 = vmatprep.subr.mxu0 0.0
    %577 = vmatpush1.msra.mxu0 %v544
    %578 = vmatprep.subr.mxu0 0.0
    %579 = vmatpush2.msra.mxu0 0.0
    %580 = vmatprep.subr.mxu0 0.0
    %581 = vmatpush2.msra.mxu0 0.0
    %582 = vmatprep.subr.mxu0 0.0
    %583 = vmatpush2.msra.mxu0 0.0
    %584 = vmatprep.subr.mxu0 0.0
    %585 = vmatpush2.msra.mxu0 0.0
    %586 = vmatprep.subr.mxu0 0.0
    %587 = vmatpush2.msra.mxu0 0.0
    %588 = vmatprep.subr.mxu0 0.0
    %589 = vmatpush2.msra.mxu0 0.0
    %590 = vmatprep.subr.mxu0 0.0
    %591 = vmatpush2.msra.mxu0 0.0
    %592 = vmatprep.subr.mxu0 0.0
    %593 = vmatpush2.msra.mxu0 0.0
    %594 = vmatprep.subr.mxu0 0.0
    %595 = vmatpush2.msra.mxu0 0.0
    %596 = vmatprep.subr.mxu0 0.0
    %597 = vmatpush2.msra.mxu0 0.0
    %598 = vmatprep.subr.mxu0 0.0
    %599 = vmatpush2.msra.mxu0 0.0
    %600 = vmatprep.subr.mxu0 0.0
    %601 = vmatpush2.msra.mxu0 0.0
    %602 = vmatprep.subr.mxu0 0.0
    %603 = vmatpush2.msra.mxu0 0.0
    %604 = vmatprep.subr.mxu0 0.0
    %605 = vmatpush2.msra.mxu0 0.0
    %606 = vmatprep.subr.mxu0 0.0
    %607 = vmatpush2.msra.mxu0 0.0
    %608 = vmatprep.subr.mxu0 0.0
    %609 = vmatpush2.msra.mxu0 0.0
    %610 = vmatprep.mubr.f32.mxu0 0.0
    %611 = vmatmul.mubr.f32.gmra.mxu0 %v159
    %v612 = vpop.f32.mrf.mxu0
    %v613 = vadd.f32 %v155, %v612
    %v614 = vpop.f32.mrf.mxu0
    %615 = vmatprep.mubr.f32.mxu0 0.0
    %616 = vmatmul.mubr.f32.gmra.mxu0 %v162
    %v617 = vpop.f32.mrf.mxu0
    %v618 = vadd.f32 %v155, %v617
    %v619 = vpop.f32.mrf.mxu0
    %620 = vmatprep.mubr.f32.mxu0 0.0
    %621 = vmatmul.mubr.f32.gmra.mxu0 %v165
    %v622 = vpop.f32.mrf.mxu0
    %v623 = vadd.f32 %v155, %v622
    %v624 = vpop.f32.mrf.mxu0
    %625 = vmatprep.mubr.f32.mxu0 0.0
    %626 = vmatmul.mubr.f32.gmra.mxu0 %v168
    %v627 = vpop.f32.mrf.mxu0
    %v628 = vadd.f32 %v155, %v627
    %v629 = vpop.f32.mrf.mxu0
    %630 = vmatprep.mubr.f32.mxu0 0.0
    %631 = vmatmul.mubr.f32.gmra.mxu0 %v171
    %v632 = vpop.f32.mrf.mxu0
    %v633 = vadd.f32 %v155, %v632
    %v634 = vpop.f32.mrf.mxu0
    %635 = vmatprep.mubr.f32.mxu0 0.0
    %636 = vmatmul.mubr.f32.gmra.mxu0 %v174
    %v637 = vpop.f32.mrf.mxu0
    %v638 = vadd.f32 %v155, %v637
    %v639 = vpop.f32.mrf.mxu0
    %640 = vmatprep.mubr.f32.mxu0 0.0
    %641 = vmatmul.mubr.f32.gmra.mxu0 %v177
    %v642 = vpop.f32.mrf.mxu0
    %v643 = vadd.f32 %v155, %v642
    %v644 = vpop.f32.mrf.mxu0
    %645 = vmatprep.mubr.f32.mxu0 0.0
    %646 = vmatmul.mubr.f32.gmra.mxu0 %v180
    %v647 = vpop.f32.mrf.mxu0
    %v648 = vadd.f32 %v155, %v647
    %v649 = vpop.f32.mrf.mxu0
    %650 = vmatprep.mubr.f32.mxu0 0.0
    %651 = vmatmul.mubr.f32.gmra.mxu0 %v183
    %v652 = vpop.f32.mrf.mxu0
    %v653 = vadd.f32 %v155, %v652
    %v654 = vpop.f32.mrf.mxu0
    %655 = vmatprep.mubr.f32.mxu0 0.0
    %656 = vmatmul.mubr.f32.gmra.mxu0 %v186
    %v657 = vpop.f32.mrf.mxu0
    %v658 = vadd.f32 %v155, %v657
    %v659 = vpop.f32.mrf.mxu0
    %660 = vmatprep.mubr.f32.mxu0 0.0
    %661 = vmatmul.mubr.f32.gmra.mxu0 %v189
    %v662 = vpop.f32.mrf.mxu0
    %v663 = vadd.f32 %v155, %v662
    %v664 = vpop.f32.mrf.mxu0
    %665 = vmatprep.mubr.f32.mxu0 0.0
    %666 = vmatmul.mubr.f32.gmra.mxu0 %v192
    %v667 = vpop.f32.mrf.mxu0
    %v668 = vadd.f32 %v155, %v667
    %v669 = vpop.f32.mrf.mxu0
    %670 = vmatprep.mubr.f32.mxu0 0.0
    %671 = vmatmul.mubr.f32.gmra.mxu0 %v195
    %v672 = vpop.f32.mrf.mxu0
    %v673 = vadd.f32 %v155, %v672
    %v674 = vpop.f32.mrf.mxu0
    %675 = vmatprep.mubr.f32.mxu0 0.0
    %676 = vmatmul.mubr.f32.gmra.mxu0 %v198
    %v677 = vpop.f32.mrf.mxu0
    %v678 = vadd.f32 %v155, %v677
    %v679 = vpop.f32.mrf.mxu0
    %680 = vmatprep.mubr.f32.mxu0 0.0
    %681 = vmatmul.mubr.f32.gmra.mxu0 %v201
    %v682 = vpop.f32.mrf.mxu0
    %v683 = vadd.f32 %v155, %v682
    %v684 = vpop.f32.mrf.mxu0
    %685 = vmatprep.mubr.f32.mxu0 0.0
    %686 = vmatmul.mubr.f32.gmra.mxu0 %v204
    %v687 = vpop.f32.mrf.mxu0
    %v688 = vadd.f32 %v155, %v687
    %v689 = vpop.f32.mrf.mxu0
    %690 = vmatprep.mubr.f32.mxu0 0.0
    %691 = vmatmul.mubr.f32.gmra.mxu0 %v207
    %v692 = vpop.f32.mrf.mxu0
    %v693 = vadd.f32 %v155, %v692
    %v694 = vpop.f32.mrf.mxu0
    %695 = vmatprep.mubr.f32.mxu0 0.0
    %696 = vmatmul.mubr.f32.gmra.mxu0 %v210
    %v697 = vpop.f32.mrf.mxu0
    %v698 = vadd.f32 %v155, %v697
    %v699 = vpop.f32.mrf.mxu0
    %700 = vmatprep.mubr.f32.mxu0 0.0
    %701 = vmatmul.mubr.f32.gmra.mxu0 %v213
    %v702 = vpop.f32.mrf.mxu0
    %v703 = vadd.f32 %v155, %v702
    %v704 = vpop.f32.mrf.mxu0
    %705 = vmatprep.mubr.f32.mxu0 0.0
    %706 = vmatmul.mubr.f32.gmra.mxu0 %v216
    %v707 = vpop.f32.mrf.mxu0
    %v708 = vadd.f32 %v155, %v707
    %v709 = vpop.f32.mrf.mxu0
    %710 = vmatprep.mubr.f32.mxu0 0.0
    %711 = vmatmul.mubr.f32.gmra.mxu0 %v219
    %v712 = vpop.f32.mrf.mxu0
    %v713 = vadd.f32 %v155, %v712
    %v714 = vpop.f32.mrf.mxu0
    %715 = vmatprep.mubr.f32.mxu0 0.0
    %716 = vmatmul.mubr.f32.gmra.mxu0 %v222
    %v717 = vpop.f32.mrf.mxu0
    %v718 = vadd.f32 %v155, %v717
    %v719 = vpop.f32.mrf.mxu0
    %720 = vmatprep.mubr.f32.mxu0 0.0
    %721 = vmatmul.mubr.f32.gmra.mxu0 %v225
    %v722 = vpop.f32.mrf.mxu0
    %v723 = vadd.f32 %v155, %v722
    %v724 = vpop.f32.mrf.mxu0
    %725 = vmatprep.mubr.f32.mxu0 0.0
    %726 = vmatmul.mubr.f32.gmra.mxu0 %v228
    %v727 = vpop.f32.mrf.mxu0
    %v728 = vadd.f32 %v155, %v727
    %v729 = vpop.f32.mrf.mxu0
    %730 = vmatprep.mubr.f32.mxu0 0.0
    %731 = vmatmul.mubr.f32.gmra.mxu0 %v231
    %v732 = vpop.f32.mrf.mxu0
    %v733 = vadd.f32 %v155, %v732
    %v734 = vpop.f32.mrf.mxu0
    %735 = vmatprep.mubr.f32.mxu0 0.0
    %736 = vmatmul.mubr.f32.gmra.mxu0 %v234
    %v737 = vpop.f32.mrf.mxu0
    %v738 = vadd.f32 %v155, %v737
    %v739 = vpop.f32.mrf.mxu0
    %740 = vmatprep.mubr.f32.mxu0 0.0
    %741 = vmatmul.mubr.f32.gmra.mxu0 %v237
    %v742 = vpop.f32.mrf.mxu0
    %v743 = vadd.f32 %v155, %v742
    %v744 = vpop.f32.mrf.mxu0
    %745 = vmatprep.mubr.f32.mxu0 0.0
    %746 = vmatmul.mubr.f32.gmra.mxu0 %v240
    %v747 = vpop.f32.mrf.mxu0
    %v748 = vadd.f32 %v155, %v747
    %v749 = vpop.f32.mrf.mxu0
    %750 = vmatprep.mubr.f32.mxu0 0.0
    %751 = vmatmul.mubr.f32.gmra.mxu0 %v243
    %v752 = vpop.f32.mrf.mxu0
    %v753 = vadd.f32 %v155, %v752
    %v754 = vpop.f32.mrf.mxu0
    %755 = vmatprep.mubr.f32.mxu0 0.0
    %756 = vmatmul.mubr.f32.gmra.mxu0 %v246
    %v757 = vpop.f32.mrf.mxu0
    %v758 = vadd.f32 %v155, %v757
    %v759 = vpop.f32.mrf.mxu0
    %760 = vmatprep.mubr.f32.mxu0 0.0
    %761 = vmatmul.mubr.f32.gmra.mxu0 %v249
    %v762 = vpop.f32.mrf.mxu0
    %v763 = vadd.f32 %v155, %v762
    %v764 = vpop.f32.mrf.mxu0
    %765 = vmatprep.mubr.f32.mxu0 0.0
    %766 = vmatmul.mubr.f32.gmra.mxu0 %v252
    %v767 = vpop.f32.mrf.mxu0
    %v768 = vadd.f32 %v155, %v767
    %v769 = vpop.f32.mrf.mxu0
    %770 = vmatprep.mubr.f32.mxu0 0.0
    %771 = vmatmul.mubr.f32.gmra.mxu0 %v255
    %v772 = vpop.f32.mrf.mxu0
    %v773 = vadd.f32 %v155, %v772
    %v774 = vpop.f32.mrf.mxu0
    %775 = vmatprep.mubr.f32.mxu0 0.0
    %776 = vmatmul.mubr.f32.gmra.mxu0 %v258
    %v777 = vpop.f32.mrf.mxu0
    %v778 = vadd.f32 %v155, %v777
    %v779 = vpop.f32.mrf.mxu0
    %780 = vmatprep.mubr.f32.mxu0 0.0
    %781 = vmatmul.mubr.f32.gmra.mxu0 %v261
    %v782 = vpop.f32.mrf.mxu0
    %v783 = vadd.f32 %v155, %v782
    %v784 = vpop.f32.mrf.mxu0
    %785 = vmatprep.mubr.f32.mxu0 0.0
    %786 = vmatmul.mubr.f32.gmra.mxu0 %v264
    %v787 = vpop.f32.mrf.mxu0
    %v788 = vadd.f32 %v155, %v787
    %v789 = vpop.f32.mrf.mxu0
    %790 = vmatprep.mubr.f32.mxu0 0.0
    %791 = vmatmul.mubr.f32.gmra.mxu0 %v267
    %v792 = vpop.f32.mrf.mxu0
    %v793 = vadd.f32 %v155, %v792
    %v794 = vpop.f32.mrf.mxu0
    %795 = vmatprep.mubr.f32.mxu0 0.0
    %796 = vmatmul.mubr.f32.gmra.mxu0 %v270
    %v797 = vpop.f32.mrf.mxu0
    %v798 = vadd.f32 %v155, %v797
    %v799 = vpop.f32.mrf.mxu0
    %800 = vmatprep.mubr.f32.mxu0 0.0
    %801 = vmatmul.mubr.f32.gmra.mxu0 %v273
    %v802 = vpop.f32.mrf.mxu0
    %v803 = vadd.f32 %v155, %v802
    %v804 = vpop.f32.mrf.mxu0
    %805 = vmatprep.mubr.f32.mxu0 0.0
    %806 = vmatmul.mubr.f32.gmra.mxu0 %v276
    %v807 = vpop.f32.mrf.mxu0
    %v808 = vadd.f32 %v155, %v807
    %v809 = vpop.f32.mrf.mxu0
    %810 = vmatprep.mubr.f32.mxu0 0.0
    %811 = vmatmul.mubr.f32.gmra.mxu0 %v279
    %v812 = vpop.f32.mrf.mxu0
    %v813 = vadd.f32 %v155, %v812
    %v814 = vpop.f32.mrf.mxu0
    %815 = vmatprep.mubr.f32.mxu0 0.0
    %816 = vmatmul.mubr.f32.gmra.mxu0 %v282
    %v817 = vpop.f32.mrf.mxu0
    %v818 = vadd.f32 %v155, %v817
    %v819 = vpop.f32.mrf.mxu0
    %820 = vmatprep.mubr.f32.mxu0 0.0
    %821 = vmatmul.mubr.f32.gmra.mxu0 %v285
    %v822 = vpop.f32.mrf.mxu0
    %v823 = vadd.f32 %v155, %v822
    %v824 = vpop.f32.mrf.mxu0
    %825 = vmatprep.mubr.f32.mxu0 0.0
    %826 = vmatmul.mubr.f32.gmra.mxu0 %v288
    %v827 = vpop.f32.mrf.mxu0
    %v828 = vadd.f32 %v155, %v827
    %v829 = vpop.f32.mrf.mxu0
    %830 = vmatprep.mubr.f32.mxu0 0.0
    %831 = vmatmul.mubr.f32.gmra.mxu0 %v291
    %v832 = vpop.f32.mrf.mxu0
    %v833 = vadd.f32 %v155, %v832
    %v834 = vpop.f32.mrf.mxu0
    %835 = vmatprep.mubr.f32.mxu0 0.0
    %836 = vmatmul.mubr.f32.gmra.mxu0 %v294
    %v837 = vpop.f32.mrf.mxu0
    %v838 = vadd.f32 %v155, %v837
    %v839 = vpop.f32.mrf.mxu0
    %840 = vmatprep.mubr.f32.mxu0 0.0
    %841 = vmatmul.mubr.f32.gmra.mxu0 %v297
    %v842 = vpop.f32.mrf.mxu0
    %v843 = vadd.f32 %v155, %v842
    %v844 = vpop.f32.mrf.mxu0
    %845 = vmatprep.mubr.f32.mxu0 0.0
    %846 = vmatmul.mubr.f32.gmra.mxu0 %v300
    %v847 = vpop.f32.mrf.mxu0
    %v848 = vadd.f32 %v155, %v847
    %v849 = vpop.f32.mrf.mxu0
    %850 = vmatprep.mubr.f32.mxu0 0.0
    %851 = vmatmul.mubr.f32.gmra.mxu0 %v303
    %v852 = vpop.f32.mrf.mxu0
    %v853 = vadd.f32 %v155, %v852
    %v854 = vpop.f32.mrf.mxu0
    %855 = vmatprep.mubr.f32.mxu0 0.0
    %856 = vmatmul.mubr.f32.gmra.mxu0 %v306
    %v857 = vpop.f32.mrf.mxu0
    %v858 = vadd.f32 %v155, %v857
    %v859 = vpop.f32.mrf.mxu0
    %860 = vmatprep.mubr.f32.mxu0 0.0
    %861 = vmatmul.mubr.f32.gmra.mxu0 %v309
    %v862 = vpop.f32.mrf.mxu0
    %v863 = vadd.f32 %v155, %v862
    %v864 = vpop.f32.mrf.mxu0
    %865 = vmatprep.mubr.f32.mxu0 0.0
    %866 = vmatmul.mubr.f32.gmra.mxu0 %v312
    %v867 = vpop.f32.mrf.mxu0
    %v868 = vadd.f32 %v155, %v867
    %v869 = vpop.f32.mrf.mxu0
    %870 = vmatprep.mubr.f32.mxu0 0.0
    %871 = vmatmul.mubr.f32.gmra.mxu0 %v315
    %v872 = vpop.f32.mrf.mxu0
    %v873 = vadd.f32 %v155, %v872
    %v874 = vpop.f32.mrf.mxu0
    %875 = vmatprep.mubr.f32.mxu0 0.0
    %876 = vmatmul.mubr.f32.gmra.mxu0 %v318
    %v877 = vpop.f32.mrf.mxu0
    %v878 = vadd.f32 %v155, %v877
    %v879 = vpop.f32.mrf.mxu0
    %880 = vmatprep.mubr.f32.mxu0 0.0
    %881 = vmatmul.mubr.f32.gmra.mxu0 %v321
    %v882 = vpop.f32.mrf.mxu0
    %v883 = vadd.f32 %v155, %v882
    %v884 = vpop.f32.mrf.mxu0
    %885 = vmatprep.mubr.f32.mxu0 0.0
    %886 = vmatmul.mubr.f32.gmra.mxu0 %v324
    %v887 = vpop.f32.mrf.mxu0
    %v888 = vadd.f32 %v155, %v887
    %v889 = vpop.f32.mrf.mxu0
    %890 = vmatprep.mubr.f32.mxu0 0.0
    %891 = vmatmul.mubr.f32.gmra.mxu0 %v327
    %v892 = vpop.f32.mrf.mxu0
    %v893 = vadd.f32 %v155, %v892
    %v894 = vpop.f32.mrf.mxu0
    %895 = vmatprep.mubr.f32.mxu0 0.0
    %896 = vmatmul.mubr.f32.gmra.mxu0 %v330
    %v897 = vpop.f32.mrf.mxu0
    %v898 = vadd.f32 %v155, %v897
    %v899 = vpop.f32.mrf.mxu0
    %900 = vmatprep.mubr.f32.mxu0 0.0
    %901 = vmatmul.mubr.f32.gmra.mxu0 %v333
    %v902 = vpop.f32.mrf.mxu0
    %v903 = vadd.f32 %v155, %v902
    %v904 = vpop.f32.mrf.mxu0
    %905 = vmatprep.mubr.f32.mxu0 0.0
    %906 = vmatmul.mubr.f32.gmra.mxu0 %v336
    %v907 = vpop.f32.mrf.mxu0
    %v908 = vadd.f32 %v155, %v907
    %v909 = vpop.f32.mrf.mxu0
    %910 = vmatprep.mubr.f32.mxu0 0.0
    %911 = vmatmul.mubr.f32.gmra.mxu0 %v339
    %v912 = vpop.f32.mrf.mxu0
    %v913 = vadd.f32 %v155, %v912
    %v914 = vpop.f32.mrf.mxu0
    %915 = vmatprep.mubr.f32.mxu0 0.0
    %916 = vmatmul.mubr.f32.gmra.mxu0 %v342
    %v917 = vpop.f32.mrf.mxu0
    %v918 = vadd.f32 %v155, %v917
    %v919 = vpop.f32.mrf.mxu0
    %920 = vmatprep.mubr.f32.mxu0 0.0
    %921 = vmatmul.mubr.f32.gmra.mxu0 %v345
    %v922 = vpop.f32.mrf.mxu0
    %v923 = vadd.f32 %v155, %v922
    %v924 = vpop.f32.mrf.mxu0
    %925 = vmatprep.mubr.f32.mxu0 0.0
    %926 = vmatmul.mubr.f32.gmra.mxu0 %v348
    %v927 = vpop.f32.mrf.mxu0
    %v928 = vadd.f32 %v155, %v927
    %v929 = vpop.f32.mrf.mxu0
    %930 = vmatprep.mubr.f32.mxu0 0.0
    %931 = vmatmul.mubr.f32.gmra.mxu0 %v351
    %v932 = vpop.f32.mrf.mxu0
    %v933 = vadd.f32 %v155, %v932
    %v934 = vpop.f32.mrf.mxu0
    %935 = vmatprep.mubr.f32.mxu0 0.0
    %936 = vmatmul.mubr.f32.gmra.mxu0 %v354
    %v937 = vpop.f32.mrf.mxu0
    %v938 = vadd.f32 %v155, %v937
    %v939 = vpop.f32.mrf.mxu0
    %940 = vmatprep.mubr.f32.mxu0 0.0
    %941 = vmatmul.mubr.f32.gmra.mxu0 %v357
    %v942 = vpop.f32.mrf.mxu0
    %v943 = vadd.f32 %v155, %v942
    %v944 = vpop.f32.mrf.mxu0
    %945 = vmatprep.mubr.f32.mxu0 0.0
    %946 = vmatmul.mubr.f32.gmra.mxu0 %v360
    %v947 = vpop.f32.mrf.mxu0
    %v948 = vadd.f32 %v155, %v947
    %v949 = vpop.f32.mrf.mxu0
    %950 = vmatprep.mubr.f32.mxu0 0.0
    %951 = vmatmul.mubr.f32.gmra.mxu0 %v363
    %v952 = vpop.f32.mrf.mxu0
    %v953 = vadd.f32 %v155, %v952
    %v954 = vpop.f32.mrf.mxu0
    %955 = vmatprep.mubr.f32.mxu0 0.0
    %956 = vmatmul.mubr.f32.gmra.mxu0 %v366
    %v957 = vpop.f32.mrf.mxu0
    %v958 = vadd.f32 %v155, %v957
    %v959 = vpop.f32.mrf.mxu0
    %960 = vmatprep.mubr.f32.mxu0 0.0
    %961 = vmatmul.mubr.f32.gmra.mxu0 %v369
    %v962 = vpop.f32.mrf.mxu0
    %v963 = vadd.f32 %v155, %v962
    %v964 = vpop.f32.mrf.mxu0
    %965 = vmatprep.mubr.f32.mxu0 0.0
    %966 = vmatmul.mubr.f32.gmra.mxu0 %v372
    %v967 = vpop.f32.mrf.mxu0
    %v968 = vadd.f32 %v155, %v967
    %v969 = vpop.f32.mrf.mxu0
    %970 = vmatprep.mubr.f32.mxu0 0.0
    %971 = vmatmul.mubr.f32.gmra.mxu0 %v375
    %v972 = vpop.f32.mrf.mxu0
    %v973 = vadd.f32 %v155, %v972
    %v974 = vpop.f32.mrf.mxu0
    %975 = vmatprep.mubr.f32.mxu0 0.0
    %976 = vmatmul.mubr.f32.gmra.mxu0 %v378
    %v977 = vpop.f32.mrf.mxu0
    %v978 = vadd.f32 %v155, %v977
    %v979 = vpop.f32.mrf.mxu0
    %980 = vmatprep.mubr.f32.mxu0 0.0
    %981 = vmatmul.mubr.f32.gmra.mxu0 %v381
    %v982 = vpop.f32.mrf.mxu0
    %v983 = vadd.f32 %v155, %v982
    %v984 = vpop.f32.mrf.mxu0
    %985 = vmatprep.mubr.f32.mxu0 0.0
    %986 = vmatmul.mubr.f32.gmra.mxu0 %v384
    %v987 = vpop.f32.mrf.mxu0
    %v988 = vadd.f32 %v155, %v987
    %v989 = vpop.f32.mrf.mxu0
    %990 = vmatprep.mubr.f32.mxu0 0.0
    %991 = vmatmul.mubr.f32.gmra.mxu0 %v387
    %v992 = vpop.f32.mrf.mxu0
    %v993 = vadd.f32 %v155, %v992
    %v994 = vpop.f32.mrf.mxu0
    %995 = vmatprep.mubr.f32.mxu0 0.0
    %996 = vmatmul.mubr.f32.gmra.mxu0 %v390
    %v997 = vpop.f32.mrf.mxu0
    %v998 = vadd.f32 %v155, %v997
    %v999 = vpop.f32.mrf.mxu0
    %1000 = vmatprep.mubr.f32.mxu0 0.0
    %1001 = vmatmul.mubr.f32.gmra.mxu0 %v393
    %v1002 = vpop.f32.mrf.mxu0
    %v1003 = vadd.f32 %v155, %v1002
    %v1004 = vpop.f32.mrf.mxu0
    %1005 = vmatprep.mubr.f32.mxu0 0.0
    %1006 = vmatmul.mubr.f32.gmra.mxu0 %v396
    %v1007 = vpop.f32.mrf.mxu0
    %v1008 = vadd.f32 %v155, %v1007
    %v1009 = vpop.f32.mrf.mxu0
    %1010 = vmatprep.mubr.f32.mxu0 0.0
    %1011 = vmatmul.mubr.f32.gmra.mxu0 %v399
    %v1012 = vpop.f32.mrf.mxu0
    %v1013 = vadd.f32 %v155, %v1012
    %v1014 = vpop.f32.mrf.mxu0
    %1015 = vmatprep.mubr.f32.mxu0 0.0
    %1016 = vmatmul.mubr.f32.gmra.mxu0 %v402
    %v1017 = vpop.f32.mrf.mxu0
    %v1018 = vadd.f32 %v155, %v1017
    %v1019 = vpop.f32.mrf.mxu0
    %1020 = vmatprep.mubr.f32.mxu0 0.0
    %1021 = vmatmul.mubr.f32.gmra.mxu0 %v405
    %v1022 = vpop.f32.mrf.mxu0
    %v1023 = vadd.f32 %v155, %v1022
    %v1024 = vpop.f32.mrf.mxu0
    %1025 = vmatprep.mubr.f32.mxu0 0.0
    %1026 = vmatmul.mubr.f32.gmra.mxu0 %v408
    %v1027 = vpop.f32.mrf.mxu0
    %v1028 = vadd.f32 %v155, %v1027
    %v1029 = vpop.f32.mrf.mxu0
    %1030 = vmatprep.mubr.f32.mxu0 0.0
    %1031 = vmatmul.mubr.f32.gmra.mxu0 %v411
    %v1032 = vpop.f32.mrf.mxu0
    %v1033 = vadd.f32 %v155, %v1032
    %v1034 = vpop.f32.mrf.mxu0
    %1035 = vmatprep.mubr.f32.mxu0 0.0
    %1036 = vmatmul.mubr.f32.gmra.mxu0 %v414
    %v1037 = vpop.f32.mrf.mxu0
    %v1038 = vadd.f32 %v155, %v1037
    %v1039 = vpop.f32.mrf.mxu0
    %1040 = vmatprep.mubr.f32.mxu0 0.0
    %1041 = vmatmul.mubr.f32.gmra.mxu0 %v417
    %v1042 = vpop.f32.mrf.mxu0
    %v1043 = vadd.f32 %v155, %v1042
    %v1044 = vpop.f32.mrf.mxu0
    %1045 = vmatprep.mubr.f32.mxu0 0.0
    %1046 = vmatmul.mubr.f32.gmra.mxu0 %v420
    %v1047 = vpop.f32.mrf.mxu0
    %v1048 = vadd.f32 %v155, %v1047
    %v1049 = vpop.f32.mrf.mxu0
    %1050 = vmatprep.mubr.f32.mxu0 0.0
    %1051 = vmatmul.mubr.f32.gmra.mxu0 %v423
    %v1052 = vpop.f32.mrf.mxu0
    %v1053 = vadd.f32 %v155, %v1052
    %v1054 = vpop.f32.mrf.mxu0
    %1055 = vmatprep.mubr.f32.mxu0 0.0
    %1056 = vmatmul.mubr.f32.gmra.mxu0 %v426
    %v1057 = vpop.f32.mrf.mxu0
    %v1058 = vadd.f32 %v155, %v1057
    %v1059 = vpop.f32.mrf.mxu0
    %1060 = vmatprep.mubr.f32.mxu0 0.0
    %1061 = vmatmul.mubr.f32.gmra.mxu0 %v429
    %v1062 = vpop.f32.mrf.mxu0
    %v1063 = vadd.f32 %v155, %v1062
    %v1064 = vpop.f32.mrf.mxu0
    %1065 = vmatprep.mubr.f32.mxu0 0.0
    %1066 = vmatmul.mubr.f32.gmra.mxu0 %v432
    %v1067 = vpop.f32.mrf.mxu0
    %v1068 = vadd.f32 %v155, %v1067
    %v1069 = vpop.f32.mrf.mxu0
    %1070 = vmatprep.mubr.f32.mxu0 0.0
    %1071 = vmatmul.mubr.f32.gmra.mxu0 %v435
    %v1072 = vpop.f32.mrf.mxu0
    %v1073 = vadd.f32 %v155, %v1072
    %v1074 = vpop.f32.mrf.mxu0
    %1075 = vmatprep.mubr.f32.mxu0 0.0
    %1076 = vmatmul.mubr.f32.gmra.mxu0 %v438
    %v1077 = vpop.f32.mrf.mxu0
    %v1078 = vadd.f32 %v155, %v1077
    %v1079 = vpop.f32.mrf.mxu0
    %1080 = vmatprep.mubr.f32.mxu0 0.0
    %1081 = vmatmul.mubr.f32.gmra.mxu0 %v441
    %v1082 = vpop.f32.mrf.mxu0
    %v1083 = vadd.f32 %v155, %v1082
    %v1084 = vpop.f32.mrf.mxu0
    %1085 = vmatprep.mubr.f32.mxu0 0.0
    %1086 = vmatmul.mubr.f32.gmra.mxu0 %v444
    %v1087 = vpop.f32.mrf.mxu0
    %v1088 = vadd.f32 %v155, %v1087
    %v1089 = vpop.f32.mrf.mxu0
    %1090 = vmatprep.mubr.f32.mxu0 0.0
    %1091 = vmatmul.mubr.f32.gmra.mxu0 %v447
    %v1092 = vpop.f32.mrf.mxu0
    %v1093 = vadd.f32 %v155, %v1092
    %v1094 = vpop.f32.mrf.mxu0
    %1095 = vmatprep.mubr.f32.mxu0 0.0
    %1096 = vmatmul.mubr.f32.gmra.mxu0 %v450
    %v1097 = vpop.f32.mrf.mxu0
    %v1098 = vadd.f32 %v155, %v1097
    %v1099 = vpop.f32.mrf.mxu0
    %1100 = vmatprep.mubr.f32.mxu0 0.0
    %1101 = vmatmul.mubr.f32.gmra.mxu0 %v453
    %v1102 = vpop.f32.mrf.mxu0
    %v1103 = vadd.f32 %v155, %v1102
    %v1104 = vpop.f32.mrf.mxu0
    %1105 = vmatprep.mubr.f32.mxu0 0.0
    %1106 = vmatmul.mubr.f32.gmra.mxu0 %v456
    %v1107 = vpop.f32.mrf.mxu0
    %v1108 = vadd.f32 %v155, %v1107
    %v1109 = vpop.f32.mrf.mxu0
    %1110 = vmatprep.mubr.f32.mxu0 0.0
    %1111 = vmatmul.mubr.f32.gmra.mxu0 %v459
    %v1112 = vpop.f32.mrf.mxu0
    %v1113 = vadd.f32 %v155, %v1112
    %v1114 = vpop.f32.mrf.mxu0
    %1115 = vmatprep.mubr.f32.mxu0 0.0
    %1116 = vmatmul.mubr.f32.gmra.mxu0 %v462
    %v1117 = vpop.f32.mrf.mxu0
    %v1118 = vadd.f32 %v155, %v1117
    %v1119 = vpop.f32.mrf.mxu0
    %1120 = vmatprep.mubr.f32.mxu0 0.0
    %1121 = vmatmul.mubr.f32.gmra.mxu0 %v465
    %v1122 = vpop.f32.mrf.mxu0
    %v1123 = vadd.f32 %v155, %v1122
    %v1124 = vpop.f32.mrf.mxu0
    %1125 = vmatprep.mubr.f32.mxu0 0.0
    %1126 = vmatmul.mubr.f32.gmra.mxu0 %v468
    %v1127 = vpop.f32.mrf.mxu0
    %v1128 = vadd.f32 %v155, %v1127
    %v1129 = vpop.f32.mrf.mxu0
    %1130 = vmatprep.mubr.f32.mxu0 0.0
    %1131 = vmatmul.mubr.f32.gmra.mxu0 %v471
    %v1132 = vpop.f32.mrf.mxu0
    %v1133 = vadd.f32 %v155, %v1132
    %v1134 = vpop.f32.mrf.mxu0
    %1135 = vmatprep.mubr.f32.mxu0 0.0
    %1136 = vmatmul.mubr.f32.gmra.mxu0 %v474
    %v1137 = vpop.f32.mrf.mxu0
    %v1138 = vadd.f32 %v155, %v1137
    %v1139 = vpop.f32.mrf.mxu0
    %1140 = vmatprep.mubr.f32.mxu0 0.0
    %1141 = vmatmul.mubr.f32.gmra.mxu0 %v477
    %v1142 = vpop.f32.mrf.mxu0
    %v1143 = vadd.f32 %v155, %v1142
    %v1144 = vpop.f32.mrf.mxu0
    %1145 = vmatprep.mubr.f32.mxu0 0.0
    %1146 = vmatmul.mubr.f32.gmra.mxu0 %v480
    %v1147 = vpop.f32.mrf.mxu0
    %v1148 = vadd.f32 %v155, %v1147
    %v1149 = vpop.f32.mrf.mxu0
    %1150 = vmatprep.mubr.f32.mxu0 0.0
    %1151 = vmatmul.mubr.f32.gmra.mxu0 %v483
    %v1152 = vpop.f32.mrf.mxu0
    %v1153 = vadd.f32 %v155, %v1152
    %v1154 = vpop.f32.mrf.mxu0
    %1155 = vmatprep.mubr.f32.mxu0 0.0
    %1156 = vmatmul.mubr.f32.gmra.mxu0 %v486
    %v1157 = vpop.f32.mrf.mxu0
    %v1158 = vadd.f32 %v155, %v1157
    %v1159 = vpop.f32.mrf.mxu0
    %1160 = vmatprep.mubr.f32.mxu0 0.0
    %1161 = vmatmul.mubr.f32.gmra.mxu0 %v489
    %v1162 = vpop.f32.mrf.mxu0
    %v1163 = vadd.f32 %v155, %v1162
    %v1164 = vpop.f32.mrf.mxu0
    %1165 = vmatprep.mubr.f32.mxu0 0.0
    %1166 = vmatmul.mubr.f32.gmra.mxu0 %v492
    %v1167 = vpop.f32.mrf.mxu0
    %v1168 = vadd.f32 %v155, %v1167
    %v1169 = vpop.f32.mrf.mxu0
    %1170 = vmatprep.mubr.f32.mxu0 0.0
    %1171 = vmatmul.mubr.f32.gmra.mxu0 %v495
    %v1172 = vpop.f32.mrf.mxu0
    %v1173 = vadd.f32 %v155, %v1172
    %v1174 = vpop.f32.mrf.mxu0
    %1175 = vmatprep.mubr.f32.mxu0 0.0
    %1176 = vmatmul.mubr.f32.gmra.mxu0 %v498
    %v1177 = vpop.f32.mrf.mxu0
    %v1178 = vadd.f32 %v155, %v1177
    %v1179 = vpop.f32.mrf.mxu0
    %1180 = vmatprep.mubr.f32.mxu0 0.0
    %1181 = vmatmul.mubr.f32.gmra.mxu0 %v501
    %v1182 = vpop.f32.mrf.mxu0
    %v1183 = vadd.f32 %v155, %v1182
    %v1184 = vpop.f32.mrf.mxu0
    %1185 = vmatprep.mubr.f32.mxu0 0.0
    %1186 = vmatmul.mubr.f32.gmra.mxu0 %v504
    %v1187 = vpop.f32.mrf.mxu0
    %v1188 = vadd.f32 %v155, %v1187
    %v1189 = vpop.f32.mrf.mxu0
    %1190 = vmatprep.mubr.f32.mxu0 0.0
    %1191 = vmatmul.mubr.f32.gmra.mxu0 %v507
    %v1192 = vpop.f32.mrf.mxu0
    %v1193 = vadd.f32 %v155, %v1192
    %v1194 = vpop.f32.mrf.mxu0
    %1195 = vmatprep.mubr.f32.mxu0 0.0
    %1196 = vmatmul.mubr.f32.gmra.mxu0 %v510
    %v1197 = vpop.f32.mrf.mxu0
    %v1198 = vadd.f32 %v155, %v1197
    %v1199 = vpop.f32.mrf.mxu0
    %1200 = vmatprep.mubr.f32.mxu0 0.0
    %1201 = vmatmul.mubr.f32.gmra.mxu0 %v513
    %v1202 = vpop.f32.mrf.mxu0
    %v1203 = vadd.f32 %v155, %v1202
    %v1204 = vpop.f32.mrf.mxu0
    %1205 = vmatprep.mubr.f32.mxu0 0.0
    %1206 = vmatmul.mubr.f32.gmra.mxu0 %v516
    %v1207 = vpop.f32.mrf.mxu0
    %v1208 = vadd.f32 %v155, %v1207
    %v1209 = vpop.f32.mrf.mxu0
    %1210 = vmatprep.mubr.f32.mxu0 0.0
    %1211 = vmatmul.mubr.f32.gmra.mxu0 %v519
    %v1212 = vpop.f32.mrf.mxu0
    %v1213 = vadd.f32 %v155, %v1212
    %v1214 = vpop.f32.mrf.mxu0
    %1215 = vmatprep.mubr.f32.mxu0 0.0
    %1216 = vmatmul.mubr.f32.gmra.mxu0 %v522
    %v1217 = vpop.f32.mrf.mxu0
    %v1218 = vadd.f32 %v155, %v1217
    %v1219 = vpop.f32.mrf.mxu0
    %1220 = vmatprep.mubr.f32.mxu0 0.0
    %1221 = vmatmul.mubr.f32.gmra.mxu0 %v525
    %v1222 = vpop.f32.mrf.mxu0
    %v1223 = vadd.f32 %v155, %v1222
    %v1224 = vpop.f32.mrf.mxu0
    %1225 = vmatprep.mubr.f32.mxu0 0.0
    %1226 = vmatmul.mubr.f32.gmra.mxu0 %v528
    %v1227 = vpop.f32.mrf.mxu0
    %v1228 = vadd.f32 %v155, %v1227
    %v1229 = vpop.f32.mrf.mxu0
    %1230 = vmatprep.mubr.f32.mxu0 0.0
    %1231 = vmatmul.mubr.f32.gmra.mxu0 %v531
    %v1232 = vpop.f32.mrf.mxu0
    %v1233 = vadd.f32 %v155, %v1232
    %v1234 = vpop.f32.mrf.mxu0
    %1235 = vmatprep.mubr.f32.mxu0 0.0
    %1236 = vmatmul.mubr.f32.gmra.mxu0 %v534
    %v1237 = vpop.f32.mrf.mxu0
    %v1238 = vadd.f32 %v155, %v1237
    %v1239 = vpop.f32.mrf.mxu0
    %1240 = vmatprep.mubr.f32.mxu0 0.0
    %1241 = vmatmul.mubr.f32.gmra.mxu0 %v537
    %v1242 = vpop.f32.mrf.mxu0
    %v1243 = vadd.f32 %v155, %v1242
    %v1244 = vpop.f32.mrf.mxu0
    %1245 = vmatprep.mubr.f32.mxu0 0.0
    %1246 = vmatmul.mubr.f32.gmra.mxu0 %v540
    %v1247 = vpop.f32.mrf.mxu0
    %v1248 = vadd.f32 %v155, %v1247
    %v1249 = vpop.f32.mrf.mxu0
    %1250 = vdwg.mxu0
    %v1251 = vmax.f32 %v613, 0.0
    %v1252 = vmax.f32 %v618, 0.0
    %v1253 = vmax.f32 %v623, 0.0
    %v1254 = vmax.f32 %v628, 0.0
    %v1255 = vmax.f32 %v633, 0.0
    %v1256 = vmax.f32 %v638, 0.0
    %v1257 = vmax.f32 %v643, 0.0
    %v1258 = vmax.f32 %v648, 0.0
    %v1259 = vmax.f32 %v653, 0.0
    %v1260 = vmax.f32 %v658, 0.0
    %v1261 = vmax.f32 %v663, 0.0
    %v1262 = vmax.f32 %v668, 0.0
    %v1263 = vmax.f32 %v673, 0.0
    %v1264 = vmax.f32 %v678, 0.0
    %v1265 = vmax.f32 %v683, 0.0
    %v1266 = vmax.f32 %v688, 0.0
    %v1267 = vmax.f32 %v693, 0.0
    %v1268 = vmax.f32 %v698, 0.0
    %v1269 = vmax.f32 %v703, 0.0
    %v1270 = vmax.f32 %v708, 0.0
    %v1271 = vmax.f32 %v713, 0.0
    %v1272 = vmax.f32 %v718, 0.0
    %v1273 = vmax.f32 %v723, 0.0
    %v1274 = vmax.f32 %v728, 0.0
    %v1275 = vmax.f32 %v733, 0.0
    %v1276 = vmax.f32 %v738, 0.0
    %v1277 = vmax.f32 %v743, 0.0
    %v1278 = vmax.f32 %v748, 0.0
    %v1279 = vmax.f32 %v753, 0.0
    %v1280 = vmax.f32 %v758, 0.0
    %v1281 = vmax.f32 %v763, 0.0
    %v1282 = vmax.f32 %v768, 0.0
    %v1283 = vmax.f32 %v773, 0.0
    %v1284 = vmax.f32 %v778, 0.0
    %v1285 = vmax.f32 %v783, 0.0
    %v1286 = vmax.f32 %v788, 0.0
    %v1287 = vmax.f32 %v793, 0.0
    %v1288 = vmax.f32 %v798, 0.0
    %v1289 = vmax.f32 %v803, 0.0
    %v1290 = vmax.f32 %v808, 0.0
    %v1291 = vmax.f32 %v813, 0.0
    %v1292 = vmax.f32 %v818, 0.0
    %v1293 = vmax.f32 %v823, 0.0
    %v1294 = vmax.f32 %v828, 0.0
    %v1295 = vmax.f32 %v833, 0.0
    %v1296 = vmax.f32 %v838, 0.0
    %v1297 = vmax.f32 %v843, 0.0
    %v1298 = vmax.f32 %v848, 0.0
    %v1299 = vmax.f32 %v853, 0.0
    %v1300 = vmax.f32 %v858, 0.0
    %v1301 = vmax.f32 %v863, 0.0
    %v1302 = vmax.f32 %v868, 0.0
    %v1303 = vmax.f32 %v873, 0.0
    %v1304 = vmax.f32 %v878, 0.0
    %v1305 = vmax.f32 %v883, 0.0
    %v1306 = vmax.f32 %v888, 0.0
    %v1307 = vmax.f32 %v893, 0.0
    %v1308 = vmax.f32 %v898, 0.0
    %v1309 = vmax.f32 %v903, 0.0
    %v1310 = vmax.f32 %v908, 0.0
    %v1311 = vmax.f32 %v913, 0.0
    %v1312 = vmax.f32 %v918, 0.0
    %v1313 = vmax.f32 %v923, 0.0
    %v1314 = vmax.f32 %v928, 0.0
    %v1315 = vmax.f32 %v933, 0.0
    %v1316 = vmax.f32 %v938, 0.0
    %v1317 = vmax.f32 %v943, 0.0
    %v1318 = vmax.f32 %v948, 0.0
    %v1319 = vmax.f32 %v953, 0.0
    %v1320 = vmax.f32 %v958, 0.0
    %v1321 = vmax.f32 %v963, 0.0
    %v1322 = vmax.f32 %v968, 0.0
    %v1323 = vmax.f32 %v973, 0.0
    %v1324 = vmax.f32 %v978, 0.0
    %v1325 = vmax.f32 %v983, 0.0
    %v1326 = vmax.f32 %v988, 0.0
    %v1327 = vmax.f32 %v993, 0.0
    %v1328 = vmax.f32 %v998, 0.0
    %v1329 = vmax.f32 %v1003, 0.0
    %v1330 = vmax.f32 %v1008, 0.0
    %v1331 = vmax.f32 %v1013, 0.0
    %v1332 = vmax.f32 %v1018, 0.0
    %v1333 = vmax.f32 %v1023, 0.0
    %v1334 = vmax.f32 %v1028, 0.0
    %v1335 = vmax.f32 %v1033, 0.0
    %v1336 = vmax.f32 %v1038, 0.0
    %v1337 = vmax.f32 %v1043, 0.0
    %v1338 = vmax.f32 %v1048, 0.0
    %v1339 = vmax.f32 %v1053, 0.0
    %v1340 = vmax.f32 %v1058, 0.0
    %v1341 = vmax.f32 %v1063, 0.0
    %v1342 = vmax.f32 %v1068, 0.0
    %v1343 = vmax.f32 %v1073, 0.0
    %v1344 = vmax.f32 %v1078, 0.0
    %v1345 = vmax.f32 %v1083, 0.0
    %v1346 = vmax.f32 %v1088, 0.0
    %v1347 = vmax.f32 %v1093, 0.0
    %v1348 = vmax.f32 %v1098, 0.0
    %v1349 = vmax.f32 %v1103, 0.0
    %v1350 = vmax.f32 %v1108, 0.0
    %v1351 = vmax.f32 %v1113, 0.0
    %v1352 = vmax.f32 %v1118, 0.0
    %v1353 = vmax.f32 %v1123, 0.0
    %v1354 = vmax.f32 %v1128, 0.0
    %v1355 = vmax.f32 %v1133, 0.0
    %v1356 = vmax.f32 %v1138, 0.0
    %v1357 = vmax.f32 %v1143, 0.0
    %v1358 = vmax.f32 %v1148, 0.0
    %v1359 = vmax.f32 %v1153, 0.0
    %v1360 = vmax.f32 %v1158, 0.0
    %v1361 = vmax.f32 %v1163, 0.0
    %v1362 = vmax.f32 %v1168, 0.0
    %v1363 = vmax.f32 %v1173, 0.0
    %v1364 = vmax.f32 %v1178, 0.0
    %v1365 = vmax.f32 %v1183, 0.0
    %v1366 = vmax.f32 %v1188, 0.0
    %v1367 = vmax.f32 %v1193, 0.0
    %v1368 = vmax.f32 %v1198, 0.0
    %v1369 = vmax.f32 %v1203, 0.0
    %v1370 = vmax.f32 %v1208, 0.0
    %v1371 = vmax.f32 %v1213, 0.0
    %v1372 = vmax.f32 %v1218, 0.0
    %v1373 = vmax.f32 %v1223, 0.0
    %v1374 = vmax.f32 %v1228, 0.0
    %v1375 = vmax.f32 %v1233, 0.0
    %v1376 = vmax.f32 %v1238, 0.0
    %v1377 = vmax.f32 %v1243, 0.0
    %v1378 = vmax.f32 %v1248, 0.0
    %v1379 = vld [vmem:[%s3] sm:$0x3]
    %v1380 = vld [vmem:[%s4] sm:$0x3]
    %1382 = vset.pattern.permute.xlu0 0
    %1383 = vperm.xlu0 %1382, %v1380
    %v1384 = vpop.permute.xlu0 %1383
    %vm1386 = vcmask 162816
    %v1388 = vsel %vm1386, %v1379, 0
    %v1391 = vsel %vm1386, %v1251, 0
    %v1394 = vsel %vm1386, %v1252, 0
    %v1397 = vsel %vm1386, %v1253, 0
    %v1400 = vsel %vm1386, %v1254, 0
    %v1403 = vsel %vm1386, %v1255, 0
    %v1406 = vsel %vm1386, %v1256, 0
    %v1409 = vsel %vm1386, %v1257, 0
    %v1412 = vsel %vm1386, %v1258, 0
    %v1415 = vsel %vm1386, %v1259, 0
    %v1418 = vsel %vm1386, %v1260, 0
    %v1421 = vsel %vm1386, %v1261, 0
    %v1424 = vsel %vm1386, %v1262, 0
    %v1427 = vsel %vm1386, %v1263, 0
    %v1430 = vsel %vm1386, %v1264, 0
    %v1433 = vsel %vm1386, %v1265, 0
    %v1436 = vsel %vm1386, %v1266, 0
    %v1439 = vsel %vm1386, %v1267, 0
    %v1442 = vsel %vm1386, %v1268, 0
    %v1445 = vsel %vm1386, %v1269, 0
    %v1448 = vsel %vm1386, %v1270, 0
    %v1451 = vsel %vm1386, %v1271, 0
    %v1454 = vsel %vm1386, %v1272, 0
    %v1457 = vsel %vm1386, %v1273, 0
    %v1460 = vsel %vm1386, %v1274, 0
    %v1463 = vsel %vm1386, %v1275, 0
    %v1466 = vsel %vm1386, %v1276, 0
    %v1469 = vsel %vm1386, %v1277, 0
    %v1472 = vsel %vm1386, %v1278, 0
    %v1475 = vsel %vm1386, %v1279, 0
    %v1478 = vsel %vm1386, %v1280, 0
    %v1481 = vsel %vm1386, %v1281, 0
    %v1484 = vsel %vm1386, %v1282, 0
    %v1487 = vsel %vm1386, %v1283, 0
    %v1490 = vsel %vm1386, %v1284, 0
    %v1493 = vsel %vm1386, %v1285, 0
    %v1496 = vsel %vm1386, %v1286, 0
    %v1499 = vsel %vm1386, %v1287, 0
    %v1502 = vsel %vm1386, %v1288, 0
    %v1505 = vsel %vm1386, %v1289, 0
    %v1508 = vsel %vm1386, %v1290, 0
    %v1511 = vsel %vm1386, %v1291, 0
    %v1514 = vsel %vm1386, %v1292, 0
    %v1517 = vsel %vm1386, %v1293, 0
    %v1520 = vsel %vm1386, %v1294, 0
    %v1523 = vsel %vm1386, %v1295, 0
    %v1526 = vsel %vm1386, %v1296, 0
    %v1529 = vsel %vm1386, %v1297, 0
    %v1532 = vsel %vm1386, %v1298, 0
    %v1535 = vsel %vm1386, %v1299, 0
    %v1538 = vsel %vm1386, %v1300, 0
    %v1541 = vsel %vm1386, %v1301, 0
    %v1544 = vsel %vm1386, %v1302, 0
    %v1547 = vsel %vm1386, %v1303, 0
    %v1550 = vsel %vm1386, %v1304, 0
    %v1553 = vsel %vm1386, %v1305, 0
    %v1556 = vsel %vm1386, %v1306, 0
    %v1559 = vsel %vm1386, %v1307, 0
    %v1562 = vsel %vm1386, %v1308, 0
    %v1565 = vsel %vm1386, %v1309, 0
    %v1568 = vsel %vm1386, %v1310, 0
    %v1571 = vsel %vm1386, %v1311, 0
    %v1574 = vsel %vm1386, %v1312, 0
    %v1577 = vsel %vm1386, %v1313, 0
    %v1580 = vsel %vm1386, %v1314, 0
    %v1583 = vsel %vm1386, %v1315, 0
    %v1586 = vsel %vm1386, %v1316, 0
    %v1589 = vsel %vm1386, %v1317, 0
    %v1592 = vsel %vm1386, %v1318, 0
    %v1595 = vsel %vm1386, %v1319, 0
    %v1598 = vsel %vm1386, %v1320, 0
    %v1601 = vsel %vm1386, %v1321, 0
    %v1604 = vsel %vm1386, %v1322, 0
    %v1607 = vsel %vm1386, %v1323, 0
    %v1610 = vsel %vm1386, %v1324, 0
    %v1613 = vsel %vm1386, %v1325, 0
    %v1616 = vsel %vm1386, %v1326, 0
    %v1619 = vsel %vm1386, %v1327, 0
    %v1622 = vsel %vm1386, %v1328, 0
    %v1625 = vsel %vm1386, %v1329, 0
    %v1628 = vsel %vm1386, %v1330, 0
    %v1631 = vsel %vm1386, %v1331, 0
    %v1634 = vsel %vm1386, %v1332, 0
    %v1637 = vsel %vm1386, %v1333, 0
    %v1640 = vsel %vm1386, %v1334, 0
    %v1643 = vsel %vm1386, %v1335, 0
    %v1646 = vsel %vm1386, %v1336, 0
    %v1649 = vsel %vm1386, %v1337, 0
    %v1652 = vsel %vm1386, %v1338, 0
    %v1655 = vsel %vm1386, %v1339, 0
    %v1658 = vsel %vm1386, %v1340, 0
    %v1661 = vsel %vm1386, %v1341, 0
    %v1664 = vsel %vm1386, %v1342, 0
    %v1667 = vsel %vm1386, %v1343, 0
    %v1670 = vsel %vm1386, %v1344, 0
    %v1673 = vsel %vm1386, %v1345, 0
    %v1676 = vsel %vm1386, %v1346, 0
    %v1679 = vsel %vm1386, %v1347, 0
    %v1682 = vsel %vm1386, %v1348, 0
    %v1685 = vsel %vm1386, %v1349, 0
    %v1688 = vsel %vm1386, %v1350, 0
    %v1691 = vsel %vm1386, %v1351, 0
    %v1694 = vsel %vm1386, %v1352, 0
    %v1697 = vsel %vm1386, %v1353, 0
    %v1700 = vsel %vm1386, %v1354, 0
    %v1703 = vsel %vm1386, %v1355, 0
    %v1706 = vsel %vm1386, %v1356, 0
    %v1709 = vsel %vm1386, %v1357, 0
    %v1712 = vsel %vm1386, %v1358, 0
    %v1715 = vsel %vm1386, %v1359, 0
    %v1718 = vsel %vm1386, %v1360, 0
    %v1721 = vsel %vm1386, %v1361, 0
    %v1724 = vsel %vm1386, %v1362, 0
    %v1727 = vsel %vm1386, %v1363, 0
    %v1730 = vsel %vm1386, %v1364, 0
    %v1733 = vsel %vm1386, %v1365, 0
    %v1736 = vsel %vm1386, %v1366, 0
    %v1739 = vsel %vm1386, %v1367, 0
    %v1742 = vsel %vm1386, %v1368, 0
    %v1745 = vsel %vm1386, %v1369, 0
    %v1748 = vsel %vm1386, %v1370, 0
    %v1751 = vsel %vm1386, %v1371, 0
    %v1754 = vsel %vm1386, %v1372, 0
    %v1757 = vsel %vm1386, %v1373, 0
    %v1760 = vsel %vm1386, %v1374, 0
    %v1763 = vsel %vm1386, %v1375, 0
    %v1766 = vsel %vm1386, %v1376, 0
    %v1769 = vsel %vm1386, %v1377, 0
    %v1772 = vsel %vm1386, %v1378, 0
    %1774 = vmatprep.subr.mxu0 0.0
    %1775 = vmatpush1.xpose.msra.mxu0 %v1436
    %1776 = vmatprep.subr.mxu0 0.0
    %1777 = vmatpush1.xpose.msra.mxu0 %v1433
    %1778 = vmatprep.subr.mxu0 0.0
    %1779 = vmatpush1.xpose.msra.mxu0 %v1430
    %1780 = vmatprep.subr.mxu0 0.0
    %1781 = vmatpush1.xpose.msra.mxu0 %v1427
    %1782 = vmatprep.subr.mxu0 0.0
    %1783 = vmatpush1.xpose.msra.mxu0 %v1424
    %1784 = vmatprep.subr.mxu0 0.0
    %1785 = vmatpush1.xpose.msra.mxu0 %v1421
    %1786 = vmatprep.subr.mxu0 0.0
    %1787 = vmatpush1.xpose.msra.mxu0 %v1418
    %1788 = vmatprep.subr.mxu0 0.0
    %1789 = vmatpush1.xpose.msra.mxu0 %v1415
    %1790 = vmatprep.subr.mxu0 0.0
    %1791 = vmatpush1.xpose.msra.mxu0 %v1412
    %1792 = vmatprep.subr.mxu0 0.0
    %1793 = vmatpush1.xpose.msra.mxu0 %v1409
    %1794 = vmatprep.subr.mxu0 0.0
    %1795 = vmatpush1.xpose.msra.mxu0 %v1406
    %1796 = vmatprep.subr.mxu0 0.0
    %1797 = vmatpush1.xpose.msra.mxu0 %v1403
    %1798 = vmatprep.subr.mxu0 0.0
    %1799 = vmatpush1.xpose.msra.mxu0 %v1400
    %1800 = vmatprep.subr.mxu0 0.0
    %1801 = vmatpush1.xpose.msra.mxu0 %v1397
    %1802 = vmatprep.subr.mxu0 0.0
    %1803 = vmatpush1.xpose.msra.mxu0 %v1394
    %1804 = vmatprep.subr.mxu0 0.0
    %1805 = vmatpush1.xpose.msra.mxu0 %v1391
    %1806 = vmatprep.subr.mxu0 0.0
    %1807 = vmatpush2.xpose.msra.mxu0 %v1484
    %1808 = vmatprep.subr.mxu0 0.0
    %1809 = vmatpush2.xpose.msra.mxu0 %v1481
    %1810 = vmatprep.subr.mxu0 0.0
    %1811 = vmatpush2.xpose.msra.mxu0 %v1478
    %1812 = vmatprep.subr.mxu0 0.0
    %1813 = vmatpush2.xpose.msra.mxu0 %v1475
    %1814 = vmatprep.subr.mxu0 0.0
    %1815 = vmatpush2.xpose.msra.mxu0 %v1472
    %1816 = vmatprep.subr.mxu0 0.0
    %1817 = vmatpush2.xpose.msra.mxu0 %v1469
    %1818 = vmatprep.subr.mxu0 0.0
    %1819 = vmatpush2.xpose.msra.mxu0 %v1466
    %1820 = vmatprep.subr.mxu0 0.0
    %1821 = vmatpush2.xpose.msra.mxu0 %v1463
    %1822 = vmatprep.subr.mxu0 0.0
    %1823 = vmatpush2.xpose.msra.mxu0 %v1460
    %1824 = vmatprep.subr.mxu0 0.0
    %1825 = vmatpush2.xpose.msra.mxu0 %v1457
    %1826 = vmatprep.subr.mxu0 0.0
    %1827 = vmatpush2.xpose.msra.mxu0 %v1454
    %1828 = vmatprep.subr.mxu0 0.0
    %1829 = vmatpush2.xpose.msra.mxu0 %v1451
    %1830 = vmatprep.subr.mxu0 0.0
    %1831 = vmatpush2.xpose.msra.mxu0 %v1448
    %1832 = vmatprep.subr.mxu0 0.0
    %1833 = vmatpush2.xpose.msra.mxu0 %v1445
    %1834 = vmatprep.subr.mxu0 0.0
    %1835 = vmatpush2.xpose.msra.mxu0 %v1442
    %1836 = vmatprep.subr.mxu0 0.0
    %1837 = vmatpush2.xpose.msra.mxu0 %v1439
    %1838 = vmatprep.mubr.f32.mxu0 0.0
    %1839 = vmatmul.mubr.f32.gmra.mxu0 %v1388
    %v1840 = vpop.f32.mrf.mxu0
    %v1841 = vadd.f32 %v1384, %v1840
    %v1842 = vpop.f32.mrf.mxu0
    %v1843 = vadd.f32 %v1384, %v1842
    %1844 = vdwg.mxu0
    %1845 = vmatprep.subr.mxu0 0.0
    %1846 = vmatpush1.xpose.msra.mxu0 %v1532
    %1847 = vmatprep.subr.mxu0 0.0
    %1848 = vmatpush1.xpose.msra.mxu0 %v1529
    %1849 = vmatprep.subr.mxu0 0.0
    %1850 = vmatpush1.xpose.msra.mxu0 %v1526
    %1851 = vmatprep.subr.mxu0 0.0
    %1852 = vmatpush1.xpose.msra.mxu0 %v1523
    %1853 = vmatprep.subr.mxu0 0.0
    %1854 = vmatpush1.xpose.msra.mxu0 %v1520
    %1855 = vmatprep.subr.mxu0 0.0
    %1856 = vmatpush1.xpose.msra.mxu0 %v1517
    %1857 = vmatprep.subr.mxu0 0.0
    %1858 = vmatpush1.xpose.msra.mxu0 %v1514
    %1859 = vmatprep.subr.mxu0 0.0
    %1860 = vmatpush1.xpose.msra.mxu0 %v1511
    %1861 = vmatprep.subr.mxu0 0.0
    %1862 = vmatpush1.xpose.msra.mxu0 %v1508
    %1863 = vmatprep.subr.mxu0 0.0
    %1864 = vmatpush1.xpose.msra.mxu0 %v1505
    %1865 = vmatprep.subr.mxu0 0.0
    %1866 = vmatpush1.xpose.msra.mxu0 %v1502
    %1867 = vmatprep.subr.mxu0 0.0
    %1868 = vmatpush1.xpose.msra.mxu0 %v1499
    %1869 = vmatprep.subr.mxu0 0.0
    %1870 = vmatpush1.xpose.msra.mxu0 %v1496
    %1871 = vmatprep.subr.mxu0 0.0
    %1872 = vmatpush1.xpose.msra.mxu0 %v1493
    %1873 = vmatprep.subr.mxu0 0.0
    %1874 = vmatpush1.xpose.msra.mxu0 %v1490
    %1875 = vmatprep.subr.mxu0 0.0
    %1876 = vmatpush1.xpose.msra.mxu0 %v1487
    %1877 = vmatprep.subr.mxu0 0.0
    %1878 = vmatpush2.xpose.msra.mxu0 %v1580
    %1879 = vmatprep.subr.mxu0 0.0
    %1880 = vmatpush2.xpose.msra.mxu0 %v1577
    %1881 = vmatprep.subr.mxu0 0.0
    %1882 = vmatpush2.xpose.msra.mxu0 %v1574
    %1883 = vmatprep.subr.mxu0 0.0
    %1884 = vmatpush2.xpose.msra.mxu0 %v1571
    %1885 = vmatprep.subr.mxu0 0.0
    %1886 = vmatpush2.xpose.msra.mxu0 %v1568
    %1887 = vmatprep.subr.mxu0 0.0
    %1888 = vmatpush2.xpose.msra.mxu0 %v1565
    %1889 = vmatprep.subr.mxu0 0.0
    %1890 = vmatpush2.xpose.msra.mxu0 %v1562
    %1891 = vmatprep.subr.mxu0 0.0
    %1892 = vmatpush2.xpose.msra.mxu0 %v1559
    %1893 = vmatprep.subr.mxu0 0.0
    %1894 = vmatpush2.xpose.msra.mxu0 %v1556
    %1895 = vmatprep.subr.mxu0 0.0
    %1896 = vmatpush2.xpose.msra.mxu0 %v1553
    %1897 = vmatprep.subr.mxu0 0.0
    %1898 = vmatpush2.xpose.msra.mxu0 %v1550
    %1899 = vmatprep.subr.mxu0 0.0
    %1900 = vmatpush2.xpose.msra.mxu0 %v1547
    %1901 = vmatprep.subr.mxu0 0.0
    %1902 = vmatpush2.xpose.msra.mxu0 %v1544
    %1903 = vmatprep.subr.mxu0 0.0
    %1904 = vmatpush2.xpose.msra.mxu0 %v1541
    %1905 = vmatprep.subr.mxu0 0.0
    %1906 = vmatpush2.xpose.msra.mxu0 %v1538
    %1907 = vmatprep.subr.mxu0 0.0
    %1908 = vmatpush2.xpose.msra.mxu0 %v1535
    %1909 = vmatprep.mubr.f32.mxu0 0.0
    %1910 = vmatmul.mubr.f32.gmra.mxu0 %v1388
    %v1911 = vpop.f32.mrf.mxu0
    %v1912 = vadd.f32 %v1384, %v1911
    %v1913 = vpop.f32.mrf.mxu0
    %v1914 = vadd.f32 %v1384, %v1913
    %1915 = vdwg.mxu0
    %1916 = vmatprep.subr.mxu0 0.0
    %1917 = vmatpush1.xpose.msra.mxu0 %v1628
    %1918 = vmatprep.subr.mxu0 0.0
    %1919 = vmatpush1.xpose.msra.mxu0 %v1625
    %1920 = vmatprep.subr.mxu0 0.0
    %1921 = vmatpush1.xpose.msra.mxu0 %v1622
    %1922 = vmatprep.subr.mxu0 0.0
    %1923 = vmatpush1.xpose.msra.mxu0 %v1619
    %1924 = vmatprep.subr.mxu0 0.0
    %1925 = vmatpush1.xpose.msra.mxu0 %v1616
    %1926 = vmatprep.subr.mxu0 0.0
    %1927 = vmatpush1.xpose.msra.mxu0 %v1613
    %1928 = vmatprep.subr.mxu0 0.0
    %1929 = vmatpush1.xpose.msra.mxu0 %v1610
    %1930 = vmatprep.subr.mxu0 0.0
    %1931 = vmatpush1.xpose.msra.mxu0 %v1607
    %1932 = vmatprep.subr.mxu0 0.0
    %1933 = vmatpush1.xpose.msra.mxu0 %v1604
    %1934 = vmatprep.subr.mxu0 0.0
    %1935 = vmatpush1.xpose.msra.mxu0 %v1601
    %1936 = vmatprep.subr.mxu0 0.0
    %1937 = vmatpush1.xpose.msra.mxu0 %v1598
    %1938 = vmatprep.subr.mxu0 0.0
    %1939 = vmatpush1.xpose.msra.mxu0 %v1595
    %1940 = vmatprep.subr.mxu0 0.0
    %1941 = vmatpush1.xpose.msra.mxu0 %v1592
    %1942 = vmatprep.subr.mxu0 0.0
    %1943 = vmatpush1.xpose.msra.mxu0 %v1589
    %1944 = vmatprep.subr.mxu0 0.0
    %1945 = vmatpush1.xpose.msra.mxu0 %v1586
    %1946 = vmatprep.subr.mxu0 0.0
    %1947 = vmatpush1.xpose.msra.mxu0 %v1583
    %1948 = vmatprep.subr.mxu0 0.0
    %1949 = vmatpush2.xpose.msra.mxu0 %v1676
    %1950 = vmatprep.subr.mxu0 0.0
    %1951 = vmatpush2.xpose.msra.mxu0 %v1673
    %1952 = vmatprep.subr.mxu0 0.0
    %1953 = vmatpush2.xpose.msra.mxu0 %v1670
    %1954 = vmatprep.subr.mxu0 0.0
    %1955 = vmatpush2.xpose.msra.mxu0 %v1667
    %1956 = vmatprep.subr.mxu0 0.0
    %1957 = vmatpush2.xpose.msra.mxu0 %v1664
    %1958 = vmatprep.subr.mxu0 0.0
    %1959 = vmatpush2.xpose.msra.mxu0 %v1661
    %1960 = vmatprep.subr.mxu0 0.0
    %1961 = vmatpush2.xpose.msra.mxu0 %v1658
    %1962 = vmatprep.subr.mxu0 0.0
    %1963 = vmatpush2.xpose.msra.mxu0 %v1655
    %1964 = vmatprep.subr.mxu0 0.0
    %1965 = vmatpush2.xpose.msra.mxu0 %v1652
    %1966 = vmatprep.subr.mxu0 0.0
    %1967 = vmatpush2.xpose.msra.mxu0 %v1649
    %1968 = vmatprep.subr.mxu0 0.0
    %1969 = vmatpush2.xpose.msra.mxu0 %v1646
    %1970 = vmatprep.subr.mxu0 0.0
    %1971 = vmatpush2.xpose.msra.mxu0 %v1643
    %1972 = vmatprep.subr.mxu0 0.0
    %1973 = vmatpush2.xpose.msra.mxu0 %v1640
    %1974 = vmatprep.subr.mxu0 0.0
    %1975 = vmatpush2.xpose.msra.mxu0 %v1637
    %1976 = vmatprep.subr.mxu0 0.0
    %1977 = vmatpush2.xpose.msra.mxu0 %v1634
    %1978 = vmatprep.subr.mxu0 0.0
    %1979 = vmatpush2.xpose.msra.mxu0 %v1631
    %1980 = vmatprep.mubr.f32.mxu0 0.0
    %1981 = vmatmul.mubr.f32.gmra.mxu0 %v1388
    %v1982 = vpop.f32.mrf.mxu0
    %v1983 = vadd.f32 %v1384, %v1982
    %v1984 = vpop.f32.mrf.mxu0
    %v1985 = vadd.f32 %v1384, %v1984
    %1986 = vdwg.mxu0
    %1987 = vmatprep.subr.mxu0 0.0
    %1988 = vmatpush1.xpose.msra.mxu0 %v1724
    %1989 = vmatprep.subr.mxu0 0.0
    %1990 = vmatpush1.xpose.msra.mxu0 %v1721
    %1991 = vmatprep.subr.mxu0 0.0
    %1992 = vmatpush1.xpose.msra.mxu0 %v1718
    %1993 = vmatprep.subr.mxu0 0.0
    %1994 = vmatpush1.xpose.msra.mxu0 %v1715
    %1995 = vmatprep.subr.mxu0 0.0
    %1996 = vmatpush1.xpose.msra.mxu0 %v1712
    %1997 = vmatprep.subr.mxu0 0.0
    %1998 = vmatpush1.xpose.msra.mxu0 %v1709
    %1999 = vmatprep.subr.mxu0 0.0
    %2000 = vmatpush1.xpose.msra.mxu0 %v1706
    %2001 = vmatprep.subr.mxu0 0.0
    %2002 = vmatpush1.xpose.msra.mxu0 %v1703
    %2003 = vmatprep.subr.mxu0 0.0
    %2004 = vmatpush1.xpose.msra.mxu0 %v1700
    %2005 = vmatprep.subr.mxu0 0.0
    %2006 = vmatpush1.xpose.msra.mxu0 %v1697
    %2007 = vmatprep.subr.mxu0 0.0
    %2008 = vmatpush1.xpose.msra.mxu0 %v1694
    %2009 = vmatprep.subr.mxu0 0.0
    %2010 = vmatpush1.xpose.msra.mxu0 %v1691
    %2011 = vmatprep.subr.mxu0 0.0
    %2012 = vmatpush1.xpose.msra.mxu0 %v1688
    %2013 = vmatprep.subr.mxu0 0.0
    %2014 = vmatpush1.xpose.msra.mxu0 %v1685
    %2015 = vmatprep.subr.mxu0 0.0
    %2016 = vmatpush1.xpose.msra.mxu0 %v1682
    %2017 = vmatprep.subr.mxu0 0.0
    %2018 = vmatpush1.xpose.msra.mxu0 %v1679
    %2019 = vmatprep.subr.mxu0 0.0
    %2020 = vmatpush2.xpose.msra.mxu0 %v1772
    %2021 = vmatprep.subr.mxu0 0.0
    %2022 = vmatpush2.xpose.msra.mxu0 %v1769
    %2023 = vmatprep.subr.mxu0 0.0
    %2024 = vmatpush2.xpose.msra.mxu0 %v1766
    %2025 = vmatprep.subr.mxu0 0.0
    %2026 = vmatpush2.xpose.msra.mxu0 %v1763
    %2027 = vmatprep.subr.mxu0 0.0
    %2028 = vmatpush2.xpose.msra.mxu0 %v1760
    %2029 = vmatprep.subr.mxu0 0.0
    %2030 = vmatpush2.xpose.msra.mxu0 %v1757
    %2031 = vmatprep.subr.mxu0 0.0
    %2032 = vmatpush2.xpose.msra.mxu0 %v1754
    %2033 = vmatprep.subr.mxu0 0.0
    %2034 = vmatpush2.xpose.msra.mxu0 %v1751
    %2035 = vmatprep.subr.mxu0 0.0
    %2036 = vmatpush2.xpose.msra.mxu0 %v1748
    %2037 = vmatprep.subr.mxu0 0.0
    %2038 = vmatpush2.xpose.msra.mxu0 %v1745
    %2039 = vmatprep.subr.mxu0 0.0
    %2040 = vmatpush2.xpose.msra.mxu0 %v1742
    %2041 = vmatprep.subr.mxu0 0.0
    %2042 = vmatpush2.xpose.msra.mxu0 %v1739
    %2043 = vmatprep.subr.mxu0 0.0
    %2044 = vmatpush2.xpose.msra.mxu0 %v1736
    %2045 = vmatprep.subr.mxu0 0.0
    %2046 = vmatpush2.xpose.msra.mxu0 %v1733
    %2047 = vmatprep.subr.mxu0 0.0
    %2048 = vmatpush2.xpose.msra.mxu0 %v1730
    %2049 = vmatprep.subr.mxu0 0.0
    %2050 = vmatpush2.xpose.msra.mxu0 %v1727
    %2051 = vmatprep.mubr.f32.mxu0 0.0
    %2052 = vmatmul.mubr.f32.gmra.mxu0 %v1388
    %v2053 = vpop.f32.mrf.mxu0
    %v2054 = vadd.f32 %v1384, %v2053
    %v2055 = vpop.f32.mrf.mxu0
    %v2056 = vadd.f32 %v1384, %v2055
    %2057 = vdwg.mxu0
    %v2066 = vcombine.low %v1841, %v1843
    %v2067 = vcombine.low %v1912, %v1914
    %v2069 = vunpack.c.l.s4 1983009808
    %v2070 = vunpack.c.0.s8 %v2069
    %v2071 = vlaneseq
    %v2072 = vshrl.u32 %v2071, 7
    %v2073 = vsub.s32 %v2070, %v2072
    %v2074 = vrot.slane %v2066, %v2073
    %v2076 = vunpack.c.l.s4 1983009808
    %v2077 = vunpack.c.0.s8 %v2076
    %v2078 = vlaneseq
    %v2079 = vshrl.u32 %v2078, 7
    %v2080 = vsub.s32 %v2077, %v2079
    %v2081 = vrot.slane %v2067, %v2080
    %v2082 = vcombine.low %v2074, %v2081
    %v2083 = vcombine.low %v1983, %v1985
    %v2084 = vcombine.low %v2054, %v2056
    %v2086 = vunpack.c.l.s4 1983009808
    %v2087 = vunpack.c.0.s8 %v2086
    %v2088 = vlaneseq
    %v2089 = vshrl.u32 %v2088, 7
    %v2090 = vsub.s32 %v2087, %v2089
    %v2091 = vrot.slane %v2083, %v2090
    %v2093 = vunpack.c.l.s4 1983009808
    %v2094 = vunpack.c.0.s8 %v2093
    %v2095 = vlaneseq
    %v2096 = vshrl.u32 %v2095, 7
    %v2097 = vsub.s32 %v2094, %v2096
    %v2098 = vrot.slane %v2084, %v2097
    %v2099 = vcombine.low %v2091, %v2098
    %2102 = vst [vmem:[#allocation2] sm:$0xff] %v2082
    %2103 = vst [vmem:[#allocation2 + $0x8] sm:$0xff] %v2099
    // Predicated region
    $region22: #{tpu_custom_call.1} parent=1 // pred_check
      _
    $region23: #{tpu_custom_call.1} parent=1 // pred_check_branch
      %2105 = sbr.rel (0) target = $region25
    $region24: #{tpu_custom_call.1} parent=1 // pred_region
      %s2107 = ssub.s32 256, 256
      %2108 = vsyncadd [#allocation3], %s2107
      %s2110 = sshll.u32 [#allocation2], 4
      %s2111 = int_to_ptr.vmem [resolvable:$true] %s2110
      %2113 = dma.vmem_to_hbm [thread:$0]  %s2111, 256, %s5, [#allocation3]
    $region25: #{tpu_custom_call.1} parent=1 // pred_fallthru
      _
    // Predicated region
    $region26: #{tpu_custom_call.1} parent=1 // pred_check
      _
    $region27: #{tpu_custom_call.1} parent=1 // pred_check_branch
      %2115 = sbr.rel (0) target = $region29
    $region28: #{tpu_custom_call.1} parent=1 // pred_region
      %2116 = dma.done [#allocation3], 256
    $region29: #{tpu_custom_call.1} parent=1 // pred_fallthru
      _
    %2117 = vsyncpa [#allocation3], 1

</llo_original>
